<compile_context>
chip_gen: v7x
topology: tpu7x:2x2x1
jax: 0.10.0
libtpu: 0.0.40
codegen_flags: <defaults>
</compile_context>

<pallas_src>
import jax
import jax.numpy as jnp
from jax.experimental import pallas as pl
from jax.experimental.pallas import tpu as pltpu


# ----------------------------- kernels -------------------------------------


def _layer1_kernel_with_w1(a_ref, x_ref, w1_ref, b1_ref, w2_ref, g_ref):
    """g = relu((A_tile @ X) @ W1 + b1) @ W2   (A contracted first)."""
    ax = jnp.dot(a_ref[...], x_ref[...], preferred_element_type=jnp.float32)
    h = jnp.dot(ax.astype(w1_ref.dtype), w1_ref[...],
                preferred_element_type=jnp.float32)
    h = jnp.maximum(h + b1_ref[...], 0.0)
    g_ref[...] = jnp.dot(h.astype(w2_ref.dtype), w2_ref[...],
                         preferred_element_type=jnp.float32).astype(g_ref.dtype)


def _layer1_kernel_folded(a_ref, xw_ref, b1_ref, w2_ref, g_ref):
    """g = relu(A_tile @ (X@W1) + b1) @ W2   (X@W1 pre-folded in wrapper)."""
    h = jnp.dot(a_ref[...], xw_ref[...], preferred_element_type=jnp.float32)
    h = jnp.maximum(h + b1_ref[...], 0.0)
    g_ref[...] = jnp.dot(h.astype(w2_ref.dtype), w2_ref[...],
                         preferred_element_type=jnp.float32).astype(g_ref.dtype)


def _make_layer2_kernel(dim_out):
    """h2 = A_tile @ G + b2 ; log_softmax over the valid feature columns."""
    def kernel(a_ref, g_ref, b2_ref, h_ref, ls_ref):
        h2 = jnp.dot(a_ref[...], g_ref[...],
                     preferred_element_type=jnp.float32) + b2_ref[...]
        h_ref[...] = h2
        # mask the zero-padded feature columns out of the softmax reduction
        col = jax.lax.broadcasted_iota(jnp.int32, h2.shape, 1)
        valid = col < dim_out
        z = jnp.where(valid, h2, jnp.float32(-1e30))
        m = jnp.max(z, axis=1, keepdims=True)
        lse = jnp.log(jnp.sum(jnp.exp(z - m), axis=1, keepdims=True))
        ls_ref[...] = jnp.where(valid, h2 - m - lse, 0.0)
    return kernel


# ----------------------------- graph prep ----------------------------------


def build_norm_adj(edge_index, num_nodes):
    """Dense symmetric-normalized adjacency with self-loops (PyG gcn_norm)."""
    src = edge_index[0]
    dst = edge_index[1]
    self_idx = jnp.arange(num_nodes, dtype=edge_index.dtype)
    src = jnp.concatenate([src, self_idx])
    dst = jnp.concatenate([dst, self_idx])
    deg = jnp.zeros((num_nodes,), jnp.float32).at[dst].add(1.0)
    dinv = jnp.where(deg > 0, 1.0 / jnp.sqrt(deg), 0.0)
    norm = dinv[src] * dinv[dst]
    a_hat = jnp.zeros((num_nodes, num_nodes), jnp.float32).at[dst, src].add(norm)
    return a_hat


def _round_up(v, m):
    return (v + m - 1) // m * m


# ----------------------------- forward -------------------------------------


def gcn_forward(x, edge_index, params, *, tm=512):
    w1, b1, w2, b2 = params
    n, dim_in = x.shape
    dim_h = w1.shape[1]
    dim_out = w2.shape[1]

    # Pad node + feature axes to multiples of 128 (lane-dense, MXU-friendly).
    n_p = _round_up(n, 128)
    din_p = _round_up(dim_in, 128)
    dh_p = _round_up(dim_h, 128)
    dout_p = _round_up(dim_out, 128)

    # Row-tile size: multiple of 128 that divides n_p.
    tm = min(tm, n_p)
    tm = max(128, (tm // 128) * 128)
    while n_p % tm != 0:
        tm -= 128
    grid = (n_p // tm,)

    # Build + pad + cast operands (bf16 for matmul operands, f32 biases).
    a_hat = build_norm_adj(edge_index, n)
    a_p = jnp.pad(a_hat, ((0, n_p - n), (0, n_p - n))).astype(jnp.bfloat16)
    x_p = jnp.pad(x, ((0, n_p - n), (0, din_p - dim_in))).astype(jnp.bfloat16)
    w1_p = jnp.pad(w1, ((0, din_p - dim_in), (0, dh_p - dim_h))).astype(jnp.bfloat16)
    w2_p = jnp.pad(w2, ((0, dh_p - dim_h), (0, dout_p - dim_out))).astype(jnp.bfloat16)
    b1_p = jnp.pad(b1, (0, dh_p - dim_h)).reshape(1, dh_p).astype(jnp.float32)
    b2_p = jnp.pad(b2, (0, dout_p - dim_out)).reshape(1, dout_p).astype(jnp.float32)

    # Contract the narrower feature width against A_hat.
    fold_w1 = dh_p < din_p
    if fold_w1:
        # X @ W1 once in the wrapper (XLA), kernel does A @ (XW1).
        f1 = jnp.dot(x_p, w1_p, preferred_element_type=jnp.float32).astype(jnp.bfloat16)
        c1 = dh_p
    else:
        f1 = x_p
        c1 = din_p

    row = lambda shape: pl.BlockSpec(shape, lambda i: (i, 0))
    bcast = lambda shape: pl.BlockSpec(shape, lambda i: (0, 0))

    cparams = pltpu.CompilerParams(
        dimension_semantics=("parallel",),
        vmem_limit_bytes=64 * 1024 * 1024,
    )

    # -------- layer 1: g = relu(GCNConv1(x)) @ W2  (row-tiled over A) -------
    if fold_w1:
        kernel1 = _layer1_kernel_folded
        in_specs1 = [row((tm, n_p)), bcast((n_p, c1)),
                     bcast((1, dh_p)), bcast((dh_p, dout_p))]
        args1 = (a_p, f1, b1_p, w2_p)
        flops1 = 2 * n_p * n_p * c1 + 2 * n_p * dh_p * dout_p
        bytes1 = 2 * (n_p * n_p + n_p * c1 + dh_p * dout_p + n_p * dout_p) + 4 * dh_p
    else:
        kernel1 = _layer1_kernel_with_w1
        in_specs1 = [row((tm, n_p)), bcast((n_p, c1)), bcast((din_p, dh_p)),
                     bcast((1, dh_p)), bcast((dh_p, dout_p))]
        args1 = (a_p, f1, w1_p, b1_p, w2_p)
        flops1 = (2 * n_p * n_p * c1 + 2 * n_p * c1 * dh_p
                  + 2 * n_p * dh_p * dout_p)
        bytes1 = 2 * (n_p * n_p + n_p * c1 + din_p * dh_p + dh_p * dout_p
                      + n_p * dout_p) + 4 * dh_p

    g = pl.pallas_call(
        kernel1,
        out_shape=jax.ShapeDtypeStruct((n_p, dout_p), jnp.bfloat16),
        grid=grid,
        in_specs=in_specs1,
        out_specs=row((tm, dout_p)),
        compiler_params=cparams,
        cost_estimate=pl.CostEstimate(
            flops=flops1, transcendentals=0, bytes_accessed=bytes1),
    )(*args1)

    # -------- layer 2: h2 = A @ g + b2 ; log_softmax  (row-tiled over A) ----
    flops2 = 2 * n_p * n_p * dout_p + 6 * n_p * dout_p
    bytes2 = 2 * (n_p * n_p + n_p * dout_p) + 4 * dout_p + 8 * n_p * dout_p

    h_p, ls_p = pl.pallas_call(
        _make_layer2_kernel(dim_out),
        out_shape=(jax.ShapeDtypeStruct((n_p, dout_p), jnp.float32),
                   jax.ShapeDtypeStruct((n_p, dout_p), jnp.float32)),
        grid=grid,
        in_specs=[row((tm, n_p)), bcast((n_p, dout_p)), bcast((1, dout_p))],
        out_specs=[row((tm, dout_p)), row((tm, dout_p))],
        compiler_params=cparams,
        cost_estimate=pl.CostEstimate(
            flops=flops2, transcendentals=n_p * dout_p + n_p,
            bytes_accessed=bytes2),
    )(a_p, g, b2_p)

    return h_p[:n, :dim_out], ls_p[:n, :dim_out]


# ----------------------------- params --------------------------------------


def init_params(key, dim_in, dim_h, dim_out):
    """Deterministic glorot-ish init for the two GCNConv layers."""
    k1, k2 = jax.random.split(key)
    s1 = jnp.sqrt(6.0 / (dim_in + dim_h))
    s2 = jnp.sqrt(6.0 / (dim_h + dim_out))
    w1 = jax.random.uniform(k1, (dim_in, dim_h), jnp.float32, -s1, s1)
    b1 = jnp.zeros((dim_h,), jnp.float32)
    w2 = jax.random.uniform(k2, (dim_h, dim_out), jnp.float32, -s2, s2)
    b2 = jnp.zeros((dim_out,), jnp.float32)
    return (w1, b1, w2, b2)


if __name__ == "__main__":
    key = jax.random.PRNGKey(0)
    k_x, k_e, k_p = jax.random.split(key, 3)

    num_nodes = 200          # pads to N_p=256 -> 2 row tiles with tm=128
    dim_in, dim_h, dim_out = 16, 32, 8
    num_edges = 600

    x = jax.random.normal(k_x, (num_nodes, dim_in), jnp.float32)
    edge_index = jax.random.randint(k_e, (2, num_edges), 0, num_nodes, jnp.int32)
    params = init_params(k_p, dim_in, dim_h, dim_out)

    fwd = jax.jit(gcn_forward, static_argnames=("tm",))
    h, log_sm = fwd(x, edge_index, params, tm=128)
    jax.block_until_ready((h, log_sm))

    assert h.shape == (num_nodes, dim_out)
    assert log_sm.shape == (num_nodes, dim_out)
    # log_softmax rows must sum to ~1 after exp
    row_sums = jnp.exp(log_sm).sum(axis=1)
    assert bool(jnp.all(jnp.abs(row_sums - 1.0) < 1e-4))
    print("KERNEL_OK")
</pallas_src>

<mosaic_0001>
module attributes {stable_mosaic.version = 11 : i64} {
  func.func private @main(%arg0: i32) attributes {dimension_semantics = [#tpu.dimension_semantics<core_parallel>], iteration_bounds = array<i64: 2>, tpu.core_type = #tpu.core_type<sc_scalar_subcore>, window_params = []} {
    return
  }
}

module attributes {stable_mosaic.version = 11 : i64} {
  func.func private @main(%arg0: i32) attributes {dimension_semantics = [#tpu.dimension_semantics<core_parallel>], iteration_bounds = array<i64: 2>, tpu.core_type = #tpu.core_type<sc_scalar_subcore>, window_params = []} {
    return
  }
}

module attributes {stable_mosaic.version = 11 : i64} {
  func.func @_layer1_kernel_with_w1(%arg0: i32, %arg1: memref<128x256xbf16, #tpu.memory_space<vmem>>, %arg2: memref<256x128xbf16, #tpu.memory_space<vmem>>, %arg3: memref<128x128xbf16, #tpu.memory_space<vmem>>, %arg4: memref<1x128xf32, #tpu.memory_space<vmem>>, %arg5: memref<128x128xbf16, #tpu.memory_space<vmem>>, %arg6: memref<128x128xbf16, #tpu.memory_space<vmem>>) attributes {dimension_semantics = [#tpu.dimension_semantics<parallel>], iteration_bounds = array<i64: 2>, scalar_prefetch = 0 : i64, scratch_operands = 0 : i64, tpu.core_type = #tpu.core_type<tc>, window_params = [{transform_indices = @transform_0, window_bounds = array<i64: 128, 256>}, {pipeline_mode = #tpu.pipeline_mode<synchronous>, transform_indices = @transform_1, window_bounds = array<i64: 256, 128>}, {pipeline_mode = #tpu.pipeline_mode<synchronous>, transform_indices = @transform_2, window_bounds = array<i64: 128, 128>}, {pipeline_mode = #tpu.pipeline_mode<synchronous>, transform_indices = @transform_3, window_bounds = array<i64: 1, 128>}, {pipeline_mode = #tpu.pipeline_mode<synchronous>, transform_indices = @transform_4, window_bounds = array<i64: 128, 128>}, {transform_indices = @transform_5, window_bounds = array<i64: 128, 128>}]} {
    %c0 = arith.constant 0 : index
    %c0_0 = arith.constant 0 : index
    %0 = vector.load %arg1[%c0, %c0_0] : memref<128x256xbf16, #tpu.memory_space<vmem>>, vector<128x256xbf16>
    %c0_1 = arith.constant 0 : index
    %c0_2 = arith.constant 0 : index
    %1 = vector.load %arg2[%c0_1, %c0_2] : memref<256x128xbf16, #tpu.memory_space<vmem>>, vector<256x128xbf16>
    %cst = arith.constant dense<0.000000e+00> : vector<128x128xf32>
    %2 = tpu.matmul %0, %1, %cst {dimension_numbers = #tpu.dot_dimension_numbers<[1], [0], [0], [1], [0, 0, 1, 1], [], []>} : vector<128x256xbf16>, vector<256x128xbf16>, vector<128x128xf32> -> vector<128x128xf32>
    %3 = arith.truncf %2 : vector<128x128xf32> to vector<128x128xbf16>
    %c0_3 = arith.constant 0 : index
    %c0_4 = arith.constant 0 : index
    %4 = vector.load %arg3[%c0_3, %c0_4] : memref<128x128xbf16, #tpu.memory_space<vmem>>, vector<128x128xbf16>
    %cst_5 = arith.constant dense<0.000000e+00> : vector<128x128xf32>
    %5 = tpu.matmul %3, %4, %cst_5 {dimension_numbers = #tpu.dot_dimension_numbers<[1], [0], [0], [1], [0, 0, 1, 1], [], []>} : vector<128x128xbf16>, vector<128x128xbf16>, vector<128x128xf32> -> vector<128x128xf32>
    %c0_6 = arith.constant 0 : index
    %c0_7 = arith.constant 0 : index
    %6 = vector.load %arg4[%c0_6, %c0_7] : memref<1x128xf32, #tpu.memory_space<vmem>>, vector<1x128xf32>
    %7 = vector.broadcast %6 : vector<1x128xf32> to vector<128x128xf32>
    %8 = arith.addf %5, %7 : vector<128x128xf32>
    %cst_8 = arith.constant 0.000000e+00 : f32
    %9 = vector.broadcast %cst_8 : f32 to vector<128x128xf32>
    %10 = arith.maximumf %8, %9 : vector<128x128xf32>
    %11 = arith.truncf %10 : vector<128x128xf32> to vector<128x128xbf16>
    %c0_9 = arith.constant 0 : index
    %c0_10 = arith.constant 0 : index
    %12 = vector.load %arg5[%c0_9, %c0_10] : memref<128x128xbf16, #tpu.memory_space<vmem>>, vector<128x128xbf16>
    %cst_11 = arith.constant dense<0.000000e+00> : vector<128x128xf32>
    %13 = tpu.matmul %11, %12, %cst_11 {dimension_numbers = #tpu.dot_dimension_numbers<[1], [0], [0], [1], [0, 0, 1, 1], [], []>} : vector<128x128xbf16>, vector<128x128xbf16>, vector<128x128xf32> -> vector<128x128xf32>
    %14 = arith.truncf %13 : vector<128x128xf32> to vector<128x128xbf16>
    %c0_12 = arith.constant 0 : index
    %c0_13 = arith.constant 0 : index
    %15 = vector.load %arg6[%c0_12, %c0_13] : memref<128x128xbf16, #tpu.memory_space<vmem>>, vector<128x128xbf16>
    tpu.vector_store %arg6[%c0_12, %c0_13], %14 {strides = array<i32>} : memref<128x128xbf16, #tpu.memory_space<vmem>>, vector<128x128xbf16>,
    return
  }
  func.func @transform_0(%arg0: i32) -> (i32, i32) {
    %c0_i32 = arith.constant 0 : i32
    %c0_i32_0 = arith.constant 0 : i32
    return %arg0, %c0_i32 : i32, i32
  }
  func.func @transform_1(%arg0: i32) -> (i32, i32) {
    %c0_i32 = arith.constant 0 : i32
    %c0_i32_0 = arith.constant 0 : i32
    %c0_i32_1 = arith.constant 0 : i32
    return %c0_i32, %c0_i32_0 : i32, i32
  }
  func.func @transform_2(%arg0: i32) -> (i32, i32) {
    %c0_i32 = arith.constant 0 : i32
    %c0_i32_0 = arith.constant 0 : i32
    %c0_i32_1 = arith.constant 0 : i32
    return %c0_i32, %c0_i32_0 : i32, i32
  }
  func.func @transform_3(%arg0: i32) -> (i32, i32) {
    %c0_i32 = arith.constant 0 : i32
    %c0_i32_0 = arith.constant 0 : i32
    %c0_i32_1 = arith.constant 0 : i32
    return %c0_i32, %c0_i32_0 : i32, i32
  }
  func.func @transform_4(%arg0: i32) -> (i32, i32) {
    %c0_i32 = arith.constant 0 : i32
    %c0_i32_0 = arith.constant 0 : i32
    %c0_i32_1 = arith.constant 0 : i32
    return %c0_i32, %c0_i32_0 : i32, i32
  }
  func.func @transform_5(%arg0: i32) -> (i32, i32) {
    %c0_i32 = arith.constant 0 : i32
    %c0_i32_0 = arith.constant 0 : i32
    return %arg0, %c0_i32 : i32, i32
  }
}

module attributes {stable_mosaic.version = 11 : i64} {
  func.func @kernel(%arg0: i32, %arg1: memref<128x256xbf16, #tpu.memory_space<vmem>>, %arg2: memref<256x128xbf16, #tpu.memory_space<vmem>>, %arg3: memref<1x128xf32, #tpu.memory_space<vmem>>, %arg4: memref<128x128xf32, #tpu.memory_space<vmem>>, %arg5: memref<128x128xf32, #tpu.memory_space<vmem>>) attributes {dimension_semantics = [#tpu.dimension_semantics<parallel>], iteration_bounds = array<i64: 2>, scalar_prefetch = 0 : i64, scratch_operands = 0 : i64, tpu.core_type = #tpu.core_type<tc>, window_params = [{transform_indices = @transform_0, window_bounds = array<i64: 128, 256>}, {pipeline_mode = #tpu.pipeline_mode<synchronous>, transform_indices = @transform_1, window_bounds = array<i64: 256, 128>}, {pipeline_mode = #tpu.pipeline_mode<synchronous>, transform_indices = @transform_2, window_bounds = array<i64: 1, 128>}, {transform_indices = @transform_3, window_bounds = array<i64: 128, 128>}, {transform_indices = @transform_4, window_bounds = array<i64: 128, 128>}]} {
    %c0 = arith.constant 0 : index
    %c0_0 = arith.constant 0 : index
    %0 = vector.load %arg1[%c0, %c0_0] : memref<128x256xbf16, #tpu.memory_space<vmem>>, vector<128x256xbf16>
    %c0_1 = arith.constant 0 : index
    %c0_2 = arith.constant 0 : index
    %1 = vector.load %arg2[%c0_1, %c0_2] : memref<256x128xbf16, #tpu.memory_space<vmem>>, vector<256x128xbf16>
    %cst = arith.constant dense<0.000000e+00> : vector<128x128xf32>
    %2 = tpu.matmul %0, %1, %cst {dimension_numbers = #tpu.dot_dimension_numbers<[1], [0], [0], [1], [0, 0, 1, 1], [], []>} : vector<128x256xbf16>, vector<256x128xbf16>, vector<128x128xf32> -> vector<128x128xf32>
    %c0_3 = arith.constant 0 : index
    %c0_4 = arith.constant 0 : index
    %3 = vector.load %arg3[%c0_3, %c0_4] : memref<1x128xf32, #tpu.memory_space<vmem>>, vector<1x128xf32>
    %4 = vector.broadcast %3 : vector<1x128xf32> to vector<128x128xf32>
    %5 = arith.addf %2, %4 : vector<128x128xf32>
    %c0_5 = arith.constant 0 : index
    %c0_6 = arith.constant 0 : index
    %6 = vector.load %arg4[%c0_5, %c0_6] : memref<128x128xf32, #tpu.memory_space<vmem>>, vector<128x128xf32>
    tpu.vector_store %arg4[%c0_5, %c0_6], %5 {strides = array<i32>} : memref<128x128xf32, #tpu.memory_space<vmem>>, vector<128x128xf32>,
    %7 = tpu.iota {dimensions = array<i32: 1>} : vector<128x128xi32>
    %c8_i32 = arith.constant 8 : i32
    %8 = vector.broadcast %c8_i32 : i32 to vector<128x128xi32>
    %9 = arith.cmpi slt, %7, %8 : vector<128x128xi32>
    %cst_7 = arith.constant -1.000000e+30 : f32
    %10 = vector.broadcast %cst_7 : f32 to vector<128x128xf32>
    %11 = arith.select %9, %5, %10 : vector<128x128xi1>, vector<128x128xf32>
    %cst_8 = arith.constant dense<0xFF800000> : vector<128xf32>
    %12 = vector.multi_reduction <maximumf>, %11, %cst_8 [1] : vector<128x128xf32> to vector<128xf32>
    %13 = vector.shape_cast %12 : vector<128xf32> to vector<128x1xf32>
    %14 = vector.broadcast %13 : vector<128x1xf32> to vector<128x128xf32>
    %15 = arith.subf %11, %14 : vector<128x128xf32>
    %16 = math.exp %15 : vector<128x128xf32>
    %cst_9 = arith.constant dense<0.000000e+00> : vector<128xf32>
    %17 = vector.multi_reduction <add>, %16, %cst_9 [1] : vector<128x128xf32> to vector<128xf32>
    %18 = vector.shape_cast %17 : vector<128xf32> to vector<128x1xf32>
    %19 = math.log %18 : vector<128x1xf32>
    %20 = vector.broadcast %13 : vector<128x1xf32> to vector<128x128xf32>
    %21 = arith.subf %5, %20 : vector<128x128xf32>
    %22 = vector.broadcast %19 : vector<128x1xf32> to vector<128x128xf32>
    %23 = arith.subf %21, %22 : vector<128x128xf32>
    %cst_10 = arith.constant 0.000000e+00 : f32
    %24 = vector.broadcast %cst_10 : f32 to vector<128x128xf32>
    %25 = arith.select %9, %23, %24 : vector<128x128xi1>, vector<128x128xf32>
    %c0_11 = arith.constant 0 : index
    %c0_12 = arith.constant 0 : index
    %26 = vector.load %arg5[%c0_11, %c0_12] : memref<128x128xf32, #tpu.memory_space<vmem>>, vector<128x128xf32>
    tpu.vector_store %arg5[%c0_11, %c0_12], %25 {strides = array<i32>} : memref<128x128xf32, #tpu.memory_space<vmem>>, vector<128x128xf32>,
    return
  }
  func.func @transform_0(%arg0: i32) -> (i32, i32) {
    %c0_i32 = arith.constant 0 : i32
    %c0_i32_0 = arith.constant 0 : i32
    return %arg0, %c0_i32 : i32, i32
  }
  func.func @transform_1(%arg0: i32) -> (i32, i32) {
    %c0_i32 = arith.constant 0 : i32
    %c0_i32_0 = arith.constant 0 : i32
    %c0_i32_1 = arith.constant 0 : i32
    return %c0_i32, %c0_i32_0 : i32, i32
  }
  func.func @transform_2(%arg0: i32) -> (i32, i32) {
    %c0_i32 = arith.constant 0 : i32
    %c0_i32_0 = arith.constant 0 : i32
    %c0_i32_1 = arith.constant 0 : i32
    return %c0_i32, %c0_i32_0 : i32, i32
  }
  func.func @transform_3(%arg0: i32) -> (i32, i32) {
    %c0_i32 = arith.constant 0 : i32
    %c0_i32_0 = arith.constant 0 : i32
    return %arg0, %c0_i32 : i32, i32
  }
  func.func @transform_4(%arg0: i32) -> (i32, i32) {
    %c0_i32 = arith.constant 0 : i32
    %c0_i32_0 = arith.constant 0 : i32
    return %arg0, %c0_i32 : i32, i32
  }
}

</mosaic_0001>

<llo_original>
// kernel: mul.1
$region0: #{mul.1}
  #allocation0 [shape = 's32[1]{0}', space=sflag, size = 0x4, scoped, tag = 'scoped memory for mul.1']
  %s0 = inlined_call_operand.vmem [shape: f32[800], index: 0, kind: input, shape index: {}]
  %s1 = inlined_call_operand.vmem [shape: f32[800], index: 1, kind: input, shape index: {}]
  %s2 = inlined_call_operand.vmem [shape: f32[800], index: 2, kind: output, shape index: {}]
  %v3 = vld [vmem:[%s0] sm:$0x7f]
  %v4 = vld [vmem:[%s1] sm:$0x7f]
  %5 = xla_tuple %v3, %v4
  %6 = xla_tuple %5
  %v7 = vmul.f32 %v3, %v4
  %8 = xla_tuple %v7
  %9 = vst [vmem:[%s2] sm:$0xff] %v7

// kernel: gcn_forward.3
$region0: #{gcn_forward.3}
  #allocation0 [shape = 'u32[]', space=smem, size = 0x4, offset = 0x4, fixed_abs, tag = 'smem constant byte address 0x4 - core index']
  #allocation1 [shape = 'u32[144,128]{1,0:T(1,128)}', space=vmem, size = 0x12000, scoped, tag = 'internal scratch']
  %s0 = inlined_call_operand.hbm [shape: bf16[256,256], index: 0, kind: input, shape index: {}]
  %s1 = inlined_call_operand.hbm [shape: bf16[256,128], index: 1, kind: input, shape index: {}]
  %s2 = inlined_call_operand.hbm [shape: f32[1,128], index: 2, kind: input, shape index: {}]
  %s3 = inlined_call_operand.hbm [shape: f32[256,128], index: 3, kind: output, shape index: {0}]
  %s4 = inlined_call_operand.hbm [shape: f32[256,128], index: 4, kind: output, shape index: {1}]
  %5 = xla_tuple %s3, %s4
  %s6 = sld [smem:[#allocation0]]
  $region65: #{gcn_forward.3} parent=0
    _
  %s8 = ssub.s32 1, %s6
  %s9 = scalar_select 0, %s8, %s6
  $region1: #{gcn_forward.3} parent=0
    #allocation2 [shape = 'u8[131072]{0}', space=vmem, size = 0x20000, scoped, tag = 'input window, operand 0']
    #allocation3 [shape = 's32[2]{0}', space=sflag, size = 0x8, scoped, tag = 'scoped memory for gcn_forward.3']
    #allocation4 [shape = 's32[2]{0}', space=sflag, size = 0x8, scoped, tag = 'scoped memory for gcn_forward.3']
    #allocation5 [shape = 'u8[65536]{0}', space=vmem, size = 0x10000, scoped, tag = 'input window, operand 1, single buffered']
    #allocation6 [shape = 's32[1]{0}', space=sflag, size = 0x4, scoped, tag = 'scoped memory for gcn_forward.3']
    #allocation7 [shape = 'u8[512]{0}', space=vmem, size = 0x400, scoped, tag = 'input window, operand 2, single buffered']
    #allocation8 [shape = 'u8[131072]{0}', space=vmem, size = 0x20000, scoped, tag = 'output window, operand 0']
    #allocation9 [shape = 'u8[131072]{0}', space=vmem, size = 0x20000, scoped, tag = 'output window, operand 1']
    #allocation10 [shape = 's32[2]{0}', space=sflag, size = 0x8, scoped, tag = 'scoped memory for gcn_forward.3']
    %10 = vsyncpa [#allocation3], 0
    %s11 = scalar_lea.sflag [#allocation3], 1
    %12 = vsyncpa %s11, 0
    %13 = vsyncpa [#allocation6], 0
    %14 = vsyncpa [#allocation4], 0
    %s15 = scalar_lea.sflag [#allocation4], 1
    %16 = vsyncpa %s15, 0
    %17 = vsyncpa [#allocation10], 0
    %s18 = scalar_lea.sflag [#allocation10], 1
    %19 = vsyncpa %s18, 0
    loop: start=0, step=1, limit=4
    $region2: #{gcn_forward.3} parent=1 // loop_pre_header
      _
    $region3: #{gcn_forward.3} parent=1 // loop_header
      %s21 = sphi 0, %s25
      %p22 = scmp.ge.s32.totalorder %s21, 4
      %s31 = sphi 0, %s33
      %s34 = sphi 0, %s31
      %s35 = sphi 0, %s34
      %s51 = sphi 0, %s35
      %s55 = sphi 0, %s55
      %s57 = sphi 0, %s55
      %s58 = sphi 0, %s57
      %s72 = sphi 0, %s58
      %s76 = sphi 0, %s76
      %s78 = sphi 0, %s76
      %s79 = sphi 0, %s78
      %s93 = sphi 0, %s79
      %s99 = sphi 0, %s101
      %s102 = sphi 0, %s99
      %s103 = sphi 0, %s102
      %s119 = sphi 0, %s103
      %s125 = sphi 0, %s127
      %s128 = sphi 0, %s125
      %s129 = sphi 0, %s128
      %s145 = sphi 0, %s129
    $region4: #{gcn_forward.3} parent=1 // loop_header_branch
      %24 = sbr.rel (%p22) target = $region8
    $region5: #{gcn_forward.3} parent=1 // loop_body
      %s26 = ssub.s32 %s21, 1
      %s27 = ssub.s32 %s21, 2
      %s28 = sadd.s32 %s21, 1
      %s29 = ssub.s32 %s21, %s28
      %p30 = scmp.eq.s32.totalorder %s29, 0
      %s32 = sadd.s32 %s31, 1
      %s33 = scalar_select %p30, %s31, %s32
      %p36 = pneg %p30
      %p37 = scmp.eq.s32.totalorder %s21, 1
      %p38 = por %p36, %p37
      %p39 = scmp.ne.s32.totalorder %s31, %s34
      %p40 = scmp.eq.s32.totalorder %s21, 0
      %p41 = por %p39, %p40
      %p42 = scmp.ne.s32.totalorder %s31, %s34
      %p43 = scmp.eq.s32.totalorder %s26, 1
      %p44 = por %p42, %p43
      %p45 = scmp.ne.s32.totalorder %s34, %s35
      %p46 = scmp.eq.s32.totalorder %s26, 0
      %p47 = por %p45, %p46
      %p48 = scmp.ne.s32.totalorder %s34, %s35
      %p49 = scmp.eq.s32.totalorder %s27, 1
      %p50 = por %p48, %p49
      %p52 = scmp.ne.s32.totalorder %s35, %s51
      %p53 = scmp.eq.s32.totalorder %s27, 0
      %p54 = por %p52, %p53
      %s56 = sadd.s32 %s55, 1
      %p59 = scmp.eq.s32.totalorder %s21, 1
      %p60 = scmp.ne.s32.totalorder %s55, %s57
      %p61 = scmp.eq.s32.totalorder %s21, 0
      %p62 = por %p60, %p61
      %p63 = scmp.ne.s32.totalorder %s55, %s57
      %p64 = scmp.eq.s32.totalorder %s26, 1
      %p65 = por %p63, %p64
      %p66 = scmp.ne.s32.totalorder %s57, %s58
      %p67 = scmp.eq.s32.totalorder %s26, 0
      %p68 = por %p66, %p67
      %p69 = scmp.ne.s32.totalorder %s57, %s58
      %p70 = scmp.eq.s32.totalorder %s27, 1
      %p71 = por %p69, %p70
      %p73 = scmp.ne.s32.totalorder %s58, %s72
      %p74 = scmp.eq.s32.totalorder %s27, 0
      %p75 = por %p73, %p74
      %s77 = sadd.s32 %s76, 1
      %p80 = scmp.eq.s32.totalorder %s21, 1
      %p81 = scmp.ne.s32.totalorder %s76, %s78
      %p82 = scmp.eq.s32.totalorder %s21, 0
      %p83 = por %p81, %p82
      %p84 = scmp.ne.s32.totalorder %s76, %s78
      %p85 = scmp.eq.s32.totalorder %s26, 1
      %p86 = por %p84, %p85
      %p87 = scmp.ne.s32.totalorder %s78, %s79
      %p88 = scmp.eq.s32.totalorder %s26, 0
      %p89 = por %p87, %p88
      %p90 = scmp.ne.s32.totalorder %s78, %s79
      %p91 = scmp.eq.s32.totalorder %s27, 1
      %p92 = por %p90, %p91
      %p94 = scmp.ne.s32.totalorder %s79, %s93
      %p95 = scmp.eq.s32.totalorder %s27, 0
      %p96 = por %p94, %p95
      %s97 = ssub.s32 %s21, %s28
      %p98 = scmp.eq.s32.totalorder %s97, 0
      %s100 = sadd.s32 %s99, 1
      %s101 = scalar_select %p98, %s99, %s100
      %p104 = pneg %p98
      %p105 = scmp.eq.s32.totalorder %s21, 1
      %p106 = por %p104, %p105
      %p107 = scmp.ne.s32.totalorder %s99, %s102
      %p108 = scmp.eq.s32.totalorder %s21, 0
      %p109 = por %p107, %p108
      %p110 = scmp.ne.s32.totalorder %s99, %s102
      %p111 = scmp.eq.s32.totalorder %s26, 1
      %p112 = por %p110, %p111
      %p113 = scmp.ne.s32.totalorder %s102, %s103
      %p114 = scmp.eq.s32.totalorder %s26, 0
      %p115 = por %p113, %p114
      %p116 = scmp.ne.s32.totalorder %s102, %s103
      %p117 = scmp.eq.s32.totalorder %s27, 1
      %p118 = por %p116, %p117
      %p120 = scmp.ne.s32.totalorder %s103, %s119
      %p121 = scmp.eq.s32.totalorder %s27, 0
      %p122 = por %p120, %p121
      %s123 = ssub.s32 %s21, %s28
      %p124 = scmp.eq.s32.totalorder %s123, 0
      %s126 = sadd.s32 %s125, 1
      %s127 = scalar_select %p124, %s125, %s126
      %p130 = pneg %p124
      %p131 = scmp.eq.s32.totalorder %s21, 1
      %p132 = por %p130, %p131
      %p133 = scmp.ne.s32.totalorder %s125, %s128
      %p134 = scmp.eq.s32.totalorder %s21, 0
      %p135 = por %p133, %p134
      %p136 = scmp.ne.s32.totalorder %s125, %s128
      %p137 = scmp.eq.s32.totalorder %s26, 1
      %p138 = por %p136, %p137
      %p139 = scmp.ne.s32.totalorder %s128, %s129
      %p140 = scmp.eq.s32.totalorder %s26, 0
      %p141 = por %p139, %p140
      %p142 = scmp.ne.s32.totalorder %s128, %s129
      %p143 = scmp.eq.s32.totalorder %s27, 1
      %p144 = por %p142, %p143
      %p146 = scmp.ne.s32.totalorder %s129, %s145
      %p147 = scmp.eq.s32.totalorder %s27, 0
      %p148 = por %p146, %p147
      %p149 = scmp.le.s32.totalorder 1, %s21
      %p150 = scmp.lt.s32.totalorder %s21, 3
      %p151 = pnand %p149, %p150
      %p152 = pneg %p151
      // Predicated region
      $region9: #{gcn_forward.3} parent=5 // pred_check
        _
      $region10: #{gcn_forward.3} parent=5 // pred_check_branch
        %154 = sbr.rel (%p151) target = $region12
      $region11: #{gcn_forward.3} parent=5 // pred_region
        %s155 = ssub.s32 %s21, 1
        // Predicated region
        $region13: #{gcn_forward.3} parent=11 // pred_check
          %p156 = pneg %p68
        $region14: #{gcn_forward.3} parent=11 // pred_check_branch
          %158 = sbr.rel (%p156) target = $region16
        $region15: #{gcn_forward.3} parent=11 // pred_region
          %s160 = ssub.s32 2048, 2048
          %161 = vsyncadd [#allocation6], %s160
          %s162 = sshll.u32 [#allocation5], 4
          %s163 = int_to_ptr.vmem [resolvable:$true] %s162
          %168 = dma.hbm_to_vmem [thread:$0]  %s1, 2048, %s163, [#allocation6], 64, 64, 4
        $region16: #{gcn_forward.3} parent=11 // pred_fallthru
          _
        // Predicated region
        $region17: #{gcn_forward.3} parent=11 // pred_check
          %p169 = pneg %p89
        $region18: #{gcn_forward.3} parent=11 // pred_check_branch
          %171 = sbr.rel (%p169) target = $region20
        $region19: #{gcn_forward.3} parent=11 // pred_region
          %s173 = ssub.s32 16, 16
          %174 = vsyncadd [#allocation6], %s173
          %s176 = sshll.u32 [#allocation7], 4
          %s177 = int_to_ptr.vmem [resolvable:$true] %s176
          %179 = dma.hbm_to_vmem [thread:$0]  %s2, 16, %s177, [#allocation6]
        $region20: #{gcn_forward.3} parent=11 // pred_fallthru
          _
      $region12: #{gcn_forward.3} parent=5 // pred_fallthru
        _
      %p180 = scmp.lt.s32.totalorder %s21, 2
      // Predicated region
      $region21: #{gcn_forward.3} parent=5 // pred_check
        %p181 = pneg %p180
      $region22: #{gcn_forward.3} parent=5 // pred_check_branch
        %183 = sbr.rel (%p181) target = $region24
      $region23: #{gcn_forward.3} parent=5 // pred_region
        // Predicated region
        $region25: #{gcn_forward.3} parent=23 // pred_check
          %p184 = pneg %p41
        $region26: #{gcn_forward.3} parent=23 // pred_check_branch
          %186 = sbr.rel (%p184) target = $region28
        $region27: #{gcn_forward.3} parent=23 // pred_region
          %s187 = sand.u32 %s31, 1
          %s188 = scalar_lea.sflag [#allocation3], %s187
          %s189 = sand.u32 %s31, 1
          %s190 = smul.addr %s189, 128
          %s191 = scalar_lea.vmem [#allocation2], %s190
          %s192 = smul.u32 16, %s21
          %s194 = ssub.s32 2048, 2048
          %195 = vsyncadd %s188, %s194
          %s196 = smul.addr %s192, 2
          %s197 = smul.addr %s196, 64
          %s198 = scalar_lea.hbm %s0, %s197
          %s199 = sshll.u32 %s191, 4
          %s200 = int_to_ptr.vmem [resolvable:$true] %s199
          %205 = dma.hbm_to_vmem [thread:$0]  %s198, 2048, %s200, %s188, 128, 128, 8
        $region28: #{gcn_forward.3} parent=23 // pred_fallthru
          _
      $region24: #{gcn_forward.3} parent=5 // pred_fallthru
        _
      %p206 = scmp.le.s32.totalorder 1, %s21
      %p207 = scmp.lt.s32.totalorder %s21, 3
      %p208 = pnand %p206, %p207
      %p209 = pneg %p208
      // Predicated region
      $region29: #{gcn_forward.3} parent=5 // pred_check
        _
      $region30: #{gcn_forward.3} parent=5 // pred_check_branch
        %211 = sbr.rel (%p208) target = $region32
      $region31: #{gcn_forward.3} parent=5 // pred_region
        %s212 = ssub.s32 %s21, 1
        %s213 = sand.u32 %s34, 1
        %s214 = scalar_lea.sflag [#allocation3], %s213
        %s215 = sand.u32 %s34, 1
        %s216 = smul.addr %s215, 128
        %s217 = scalar_lea.vmem [#allocation2], %s216
        // Predicated region
        $region33: #{gcn_forward.3} parent=31 // pred_check
          %p218 = pneg %p47
        $region34: #{gcn_forward.3} parent=31 // pred_check_branch
          %220 = sbr.rel (%p218) target = $region36
        $region35: #{gcn_forward.3} parent=31 // pred_region
          %221 = dma.done %s214, 2048
        $region36: #{gcn_forward.3} parent=31 // pred_fallthru
          _
        // Predicated region
        $region37: #{gcn_forward.3} parent=31 // pred_check
          %p222 = pneg %p68
        $region38: #{gcn_forward.3} parent=31 // pred_check_branch
          %224 = sbr.rel (%p222) target = $region40
        $region39: #{gcn_forward.3} parent=31 // pred_region
          %225 = dma.done [#allocation6], 2048
        $region40: #{gcn_forward.3} parent=31 // pred_fallthru
          _
        // Predicated region
        $region41: #{gcn_forward.3} parent=31 // pred_check
          %p226 = pneg %p89
        $region42: #{gcn_forward.3} parent=31 // pred_check_branch
          %228 = sbr.rel (%p226) target = $region44
        $region43: #{gcn_forward.3} parent=31 // pred_region
          %229 = dma.done [#allocation6], 16
        $region44: #{gcn_forward.3} parent=31 // pred_fallthru
          _
        %s230 = sand.u32 %s34, 1
        %s231 = scalar_lea.sflag [#allocation3], %s230
        %s232 = sand.u32 %s34, 1
        %s233 = smul.addr %s232, 128
        %s234 = scalar_lea.vmem [#allocation2], %s233
        %p235 = pneg %p47
        %p236 = pneg %p44
        %p237 = pneg %p68
        %p238 = pneg %p65
        %p239 = pneg %p89
        %p240 = pneg %p86
        %p241 = pneg %p115
        %p242 = pneg %p112
        %s243 = sand.u32 %s102, 1
        %s244 = scalar_lea.sflag [#allocation4], %s243
        %s245 = sand.u32 %s102, 1
        %s246 = smul.addr %s245, 128
        %s247 = scalar_lea.vmem [#allocation8], %s246
        %p248 = pneg %p141
        %p249 = pneg %p138
        %s250 = sand.u32 %s128, 1
        %s251 = scalar_lea.sflag [#allocation10], %s250
        %s252 = sand.u32 %s128, 1
        %s253 = smul.addr %s252, 128
        %s254 = scalar_lea.vmem [#allocation9], %s253
        %s255 = smul.u32 16, %s26
        %s256 = smul.u32 16, %s26
        %s257 = smul.u32 16, %s26
        %v259 = vld [vmem:[%s217] sm:$0xff]
        %v260 = vld [vmem:[%s217 + $0x8] sm:$0xff]
        %v261 = vld [vmem:[%s217 + $0x10] sm:$0xff]
        %v262 = vld [vmem:[%s217 + $0x18] sm:$0xff]
        %v263 = vld [vmem:[%s217 + $0x20] sm:$0xff]
        %v264 = vld [vmem:[%s217 + $0x28] sm:$0xff]
        %v265 = vld [vmem:[%s217 + $0x30] sm:$0xff]
        %v266 = vld [vmem:[%s217 + $0x38] sm:$0xff]
        %v267 = vld [vmem:[%s217 + $0x40] sm:$0xff]
        %v268 = vld [vmem:[%s217 + $0x48] sm:$0xff]
        %v269 = vld [vmem:[%s217 + $0x50] sm:$0xff]
        %v270 = vld [vmem:[%s217 + $0x58] sm:$0xff]
        %v271 = vld [vmem:[%s217 + $0x60] sm:$0xff]
        %v272 = vld [vmem:[%s217 + $0x68] sm:$0xff]
        %v273 = vld [vmem:[%s217 + $0x70] sm:$0xff]
        %v274 = vld [vmem:[%s217 + $0x78] sm:$0xff]
        %v275 = vld [vmem:[#allocation5] sm:$0xf]
        %v276 = vld [vmem:[#allocation5 + $0x4] sm:$0xf]
        %v277 = vld [vmem:[#allocation5 + $0x8] sm:$0xf]
        %v278 = vld [vmem:[#allocation5 + $0xc] sm:$0xf]
        %v279 = vld [vmem:[#allocation5 + $0x10] sm:$0xf]
        %v280 = vld [vmem:[#allocation5 + $0x14] sm:$0xf]
        %v281 = vld [vmem:[#allocation5 + $0x18] sm:$0xf]
        %v282 = vld [vmem:[#allocation5 + $0x1c] sm:$0xf]
        %v283 = vld [vmem:[#allocation5 + $0x20] sm:$0xf]
        %v284 = vld [vmem:[#allocation5 + $0x24] sm:$0xf]
        %v285 = vld [vmem:[#allocation5 + $0x28] sm:$0xf]
        %v286 = vld [vmem:[#allocation5 + $0x2c] sm:$0xf]
        %v287 = vld [vmem:[#allocation5 + $0x30] sm:$0xf]
        %v288 = vld [vmem:[#allocation5 + $0x34] sm:$0xf]
        %v289 = vld [vmem:[#allocation5 + $0x38] sm:$0xf]
        %v290 = vld [vmem:[#allocation5 + $0x3c] sm:$0xf]
        %v291 = vld [vmem:[#allocation5 + $0x40] sm:$0xf]
        %v292 = vld [vmem:[#allocation5 + $0x44] sm:$0xf]
        %v293 = vld [vmem:[#allocation5 + $0x48] sm:$0xf]
        %v294 = vld [vmem:[#allocation5 + $0x4c] sm:$0xf]
        %v295 = vld [vmem:[#allocation5 + $0x50] sm:$0xf]
        %v296 = vld [vmem:[#allocation5 + $0x54] sm:$0xf]
        %v297 = vld [vmem:[#allocation5 + $0x58] sm:$0xf]
        %v298 = vld [vmem:[#allocation5 + $0x5c] sm:$0xf]
        %v299 = vld [vmem:[#allocation5 + $0x60] sm:$0xf]
        %v300 = vld [vmem:[#allocation5 + $0x64] sm:$0xf]
        %v301 = vld [vmem:[#allocation5 + $0x68] sm:$0xf]
        %v302 = vld [vmem:[#allocation5 + $0x6c] sm:$0xf]
        %v303 = vld [vmem:[#allocation5 + $0x70] sm:$0xf]
        %v304 = vld [vmem:[#allocation5 + $0x74] sm:$0xf]
        %v305 = vld [vmem:[#allocation5 + $0x78] sm:$0xf]
        %v306 = vld [vmem:[#allocation5 + $0x7c] sm:$0xf]
        %v307 = vld [vmem:[#allocation7] sm:$0x1]
        %v309 = vlaneseq
        %v310 = vshrl.u32 %v309, 7
        %v311 = vsub.s32 0, %v310
        %v312 = vrot.slane %v307, %v311
        %v330 = vunpack.c.l.b16 %v259
        %v331 = vunpack.c.h.b16 %v259
        %v332 = vunpack.c.l.b16 %v260
        %v333 = vunpack.c.h.b16 %v260
        %v334 = vunpack.c.l.b16 %v261
        %v335 = vunpack.c.h.b16 %v261
        %v336 = vunpack.c.l.b16 %v262
        %v337 = vunpack.c.h.b16 %v262
        %v338 = vunpack.c.l.b16 %v263
        %v339 = vunpack.c.h.b16 %v263
        %v340 = vunpack.c.l.b16 %v264
        %v341 = vunpack.c.h.b16 %v264
        %v342 = vunpack.c.l.b16 %v265
        %v343 = vunpack.c.h.b16 %v265
        %v344 = vunpack.c.l.b16 %v266
        %v345 = vunpack.c.h.b16 %v266
        %v346 = vunpack.c.l.b16 %v267
        %v347 = vunpack.c.h.b16 %v267
        %v348 = vunpack.c.l.b16 %v268
        %v349 = vunpack.c.h.b16 %v268
        %v350 = vunpack.c.l.b16 %v269
        %v351 = vunpack.c.h.b16 %v269
        %v352 = vunpack.c.l.b16 %v270
        %v353 = vunpack.c.h.b16 %v270
        %v354 = vunpack.c.l.b16 %v271
        %v355 = vunpack.c.h.b16 %v271
        %v356 = vunpack.c.l.b16 %v272
        %v357 = vunpack.c.h.b16 %v272
        %v358 = vunpack.c.l.b16 %v273
        %v359 = vunpack.c.h.b16 %v273
        %v360 = vunpack.c.l.b16 %v274
        %v361 = vunpack.c.h.b16 %v274
        %v362 = vpack.c.b16 %v332, %v330
        %v363 = vpack.c.b16 %v333, %v331
        %v364 = vpack.c.b16 %v336, %v334
        %v365 = vpack.c.b16 %v337, %v335
        %v366 = vpack.c.b16 %v340, %v338
        %v367 = vpack.c.b16 %v341, %v339
        %v368 = vpack.c.b16 %v344, %v342
        %v369 = vpack.c.b16 %v345, %v343
        %v370 = vpack.c.b16 %v348, %v346
        %v371 = vpack.c.b16 %v349, %v347
        %v372 = vpack.c.b16 %v352, %v350
        %v373 = vpack.c.b16 %v353, %v351
        %v374 = vpack.c.b16 %v356, %v354
        %v375 = vpack.c.b16 %v357, %v355
        %v376 = vpack.c.b16 %v360, %v358
        %v377 = vpack.c.b16 %v361, %v359
        %v426 = vunpack.c.l.b16 %v275
        %v427 = vunpack.c.l.b16 %v276
        %v428 = vunpack.c.l.b16 %v277
        %v429 = vunpack.c.l.b16 %v278
        %v430 = vunpack.c.l.b16 %v279
        %v431 = vunpack.c.l.b16 %v280
        %v432 = vunpack.c.l.b16 %v281
        %v433 = vunpack.c.l.b16 %v282
        %v434 = vunpack.c.l.b16 %v283
        %v435 = vunpack.c.l.b16 %v284
        %v436 = vunpack.c.l.b16 %v285
        %v437 = vunpack.c.l.b16 %v286
        %v438 = vunpack.c.l.b16 %v287
        %v439 = vunpack.c.l.b16 %v288
        %v440 = vunpack.c.l.b16 %v289
        %v441 = vunpack.c.l.b16 %v290
        %v442 = vunpack.c.l.b16 %v291
        %v443 = vunpack.c.l.b16 %v292
        %v444 = vunpack.c.l.b16 %v293
        %v445 = vunpack.c.l.b16 %v294
        %v446 = vunpack.c.l.b16 %v295
        %v447 = vunpack.c.l.b16 %v296
        %v448 = vunpack.c.l.b16 %v297
        %v449 = vunpack.c.l.b16 %v298
        %v450 = vunpack.c.l.b16 %v299
        %v451 = vunpack.c.l.b16 %v300
        %v452 = vunpack.c.l.b16 %v301
        %v453 = vunpack.c.l.b16 %v302
        %v454 = vunpack.c.l.b16 %v303
        %v455 = vunpack.c.l.b16 %v304
        %v456 = vunpack.c.l.b16 %v305
        %v457 = vunpack.c.l.b16 %v306
        %v458 = vpack.c.b16 %v427, %v426
        %v459 = vpack.c.b16 %v429, %v428
        %v460 = vpack.c.b16 %v431, %v430
        %v461 = vpack.c.b16 %v433, %v432
        %v462 = vpack.c.b16 %v435, %v434
        %v463 = vpack.c.b16 %v437, %v436
        %v464 = vpack.c.b16 %v439, %v438
        %v465 = vpack.c.b16 %v441, %v440
        %v466 = vpack.c.b16 %v443, %v442
        %v467 = vpack.c.b16 %v445, %v444
        %v468 = vpack.c.b16 %v447, %v446
        %v469 = vpack.c.b16 %v449, %v448
        %v470 = vpack.c.b16 %v451, %v450
        %v471 = vpack.c.b16 %v453, %v452
        %v472 = vpack.c.b16 %v455, %v454
        %v473 = vpack.c.b16 %v457, %v456
        %490 = vmatprep.subr.bf16.mxu0 0
        %491 = vmatpush1.bf16.msra.mxu0 %v458
        %492 = vmatprep.subr.bf16.mxu0 0
        %493 = vmatpush1.bf16.msra.mxu0 %v459
        %494 = vmatprep.subr.bf16.mxu0 0
        %495 = vmatpush1.bf16.msra.mxu0 %v460
        %496 = vmatprep.subr.bf16.mxu0 0
        %497 = vmatpush1.bf16.msra.mxu0 %v461
        %498 = vmatprep.subr.bf16.mxu0 0
        %499 = vmatpush1.bf16.msra.mxu0 %v462
        %500 = vmatprep.subr.bf16.mxu0 0
        %501 = vmatpush1.bf16.msra.mxu0 %v463
        %502 = vmatprep.subr.bf16.mxu0 0
        %503 = vmatpush1.bf16.msra.mxu0 %v464
        %504 = vmatprep.subr.bf16.mxu0 0
        %505 = vmatpush1.bf16.msra.mxu0 %v465
        %506 = vmatprep.subr.bf16.mxu0 0
        %507 = vmatpush1.bf16.msra.mxu0 %v466
        %508 = vmatprep.subr.bf16.mxu0 0
        %509 = vmatpush1.bf16.msra.mxu0 %v467
        %510 = vmatprep.subr.bf16.mxu0 0
        %511 = vmatpush1.bf16.msra.mxu0 %v468
        %512 = vmatprep.subr.bf16.mxu0 0
        %513 = vmatpush1.bf16.msra.mxu0 %v469
        %514 = vmatprep.subr.bf16.mxu0 0
        %515 = vmatpush1.bf16.msra.mxu0 %v470
        %516 = vmatprep.subr.bf16.mxu0 0
        %517 = vmatpush1.bf16.msra.mxu0 %v471
        %518 = vmatprep.subr.bf16.mxu0 0
        %519 = vmatpush1.bf16.msra.mxu0 %v472
        %520 = vmatprep.subr.bf16.mxu0 0
        %521 = vmatpush1.bf16.msra.mxu0 %v473
        %522 = vmatprep.mubr.bf16.mxu0 %v363
        %523 = vmatmul.mubr.bf16.gmra.mrb[0].mxu0 %v362
        %v524 = vpop.f32.mrb[0].mxu0
        %v525 = vadd.f32 %v312, %v524
        %v526 = vpop.f32.mrb[0].mxu0
        %v527 = vpop.f32.mrb[0].mxu0
        %v528 = vadd.f32 %v312, %v527
        %v529 = vpop.f32.mrb[0].mxu0
        %530 = vmatprep.mubr.bf16.mxu0 %v365
        %531 = vmatmul.mubr.bf16.gmra.mrb[0].mxu0 %v364
        %v532 = vpop.f32.mrb[0].mxu0
        %v533 = vadd.f32 %v312, %v532
        %v534 = vpop.f32.mrb[0].mxu0
        %v535 = vpop.f32.mrb[0].mxu0
        %v536 = vadd.f32 %v312, %v535
        %v537 = vpop.f32.mrb[0].mxu0
        %538 = vmatprep.mubr.bf16.mxu0 %v367
        %539 = vmatmul.mubr.bf16.gmra.mrb[0].mxu0 %v366
        %v540 = vpop.f32.mrb[0].mxu0
        %v541 = vadd.f32 %v312, %v540
        %v542 = vpop.f32.mrb[0].mxu0
        %v543 = vpop.f32.mrb[0].mxu0
        %v544 = vadd.f32 %v312, %v543
        %v545 = vpop.f32.mrb[0].mxu0
        %546 = vmatprep.mubr.bf16.mxu0 %v369
        %547 = vmatmul.mubr.bf16.gmra.mrb[0].mxu0 %v368
        %v548 = vpop.f32.mrb[0].mxu0
        %v549 = vadd.f32 %v312, %v548
        %v550 = vpop.f32.mrb[0].mxu0
        %v551 = vpop.f32.mrb[0].mxu0
        %v552 = vadd.f32 %v312, %v551
        %v553 = vpop.f32.mrb[0].mxu0
        %554 = vmatprep.mubr.bf16.mxu0 %v371
        %555 = vmatmul.mubr.bf16.gmra.mrb[0].mxu0 %v370
        %v556 = vpop.f32.mrb[0].mxu0
        %v557 = vadd.f32 %v312, %v556
        %v558 = vpop.f32.mrb[0].mxu0
        %v559 = vpop.f32.mrb[0].mxu0
        %v560 = vadd.f32 %v312, %v559
        %v561 = vpop.f32.mrb[0].mxu0
        %562 = vmatprep.mubr.bf16.mxu0 %v373
        %563 = vmatmul.mubr.bf16.gmra.mrb[0].mxu0 %v372
        %v564 = vpop.f32.mrb[0].mxu0
        %v565 = vadd.f32 %v312, %v564
        %v566 = vpop.f32.mrb[0].mxu0
        %v567 = vpop.f32.mrb[0].mxu0
        %v568 = vadd.f32 %v312, %v567
        %v569 = vpop.f32.mrb[0].mxu0
        %570 = vmatprep.mubr.bf16.mxu0 %v375
        %571 = vmatmul.mubr.bf16.gmra.mrb[0].mxu0 %v374
        %v572 = vpop.f32.mrb[0].mxu0
        %v573 = vadd.f32 %v312, %v572
        %v574 = vpop.f32.mrb[0].mxu0
        %v575 = vpop.f32.mrb[0].mxu0
        %v576 = vadd.f32 %v312, %v575
        %v577 = vpop.f32.mrb[0].mxu0
        %578 = vmatprep.mubr.bf16.mxu0 %v377
        %579 = vmatmul.mubr.bf16.gmra.mrb[0].mxu0 %v376
        %v580 = vpop.f32.mrb[0].mxu0
        %v581 = vadd.f32 %v312, %v580
        %v582 = vpop.f32.mrb[0].mxu0
        %v583 = vpop.f32.mrb[0].mxu0
        %v584 = vadd.f32 %v312, %v583
        %v585 = vpop.f32.mrb[0].mxu0
        %586 = vdwg.mxu0
        %587 = vst [vmem:[%s247] sm:$0xff] %v525
        %588 = vst [vmem:[%s247 + $0x8] sm:$0xff] %v528
        %589 = vst [vmem:[%s247 + $0x10] sm:$0xff] %v533
        %590 = vst [vmem:[%s247 + $0x18] sm:$0xff] %v536
        %591 = vst [vmem:[%s247 + $0x20] sm:$0xff] %v541
        %592 = vst [vmem:[%s247 + $0x28] sm:$0xff] %v544
        %593 = vst [vmem:[%s247 + $0x30] sm:$0xff] %v549
        %594 = vst [vmem:[%s247 + $0x38] sm:$0xff] %v552
        %595 = vst [vmem:[%s247 + $0x40] sm:$0xff] %v557
        %596 = vst [vmem:[%s247 + $0x48] sm:$0xff] %v560
        %597 = vst [vmem:[%s247 + $0x50] sm:$0xff] %v565
        %598 = vst [vmem:[%s247 + $0x58] sm:$0xff] %v568
        %599 = vst [vmem:[%s247 + $0x60] sm:$0xff] %v573
        %600 = vst [vmem:[%s247 + $0x68] sm:$0xff] %v576
        %601 = vst [vmem:[%s247 + $0x70] sm:$0xff] %v581
        %602 = vst [vmem:[%s247 + $0x78] sm:$0xff] %v584
        %v603 = vlaneseq
        %v604 = vand.u32 %v603, 127
        %vm605 = vcmp.lt.s32.totalorder %v604, 8
        %v606 = vsel %vm605, %v525, -1e+30
        %v607 = vsel %vm605, %v528, -1e+30
        %v608 = vsel %vm605, %v533, -1e+30
        %v609 = vsel %vm605, %v536, -1e+30
        %v610 = vsel %vm605, %v541, -1e+30
        %v611 = vsel %vm605, %v544, -1e+30
        %v612 = vsel %vm605, %v549, -1e+30
        %v613 = vsel %vm605, %v552, -1e+30
        %v614 = vsel %vm605, %v557, -1e+30
        %v615 = vsel %vm605, %v560, -1e+30
        %v616 = vsel %vm605, %v565, -1e+30
        %v617 = vsel %vm605, %v568, -1e+30
        %v618 = vsel %vm605, %v573, -1e+30
        %v619 = vsel %vm605, %v576, -1e+30
        %v620 = vsel %vm605, %v581, -1e+30
        %v621 = vsel %vm605, %v584, -1e+30
        %622 = vmax.xlane.f32.xlu0 %v606
        %v623 = vpop.xlane.xlu0 %622
        %624 = vmax.xlane.f32.xlu0 %v607
        %v625 = vpop.xlane.xlu0 %624
        %626 = vmax.xlane.f32.xlu0 %v608
        %v627 = vpop.xlane.xlu0 %626
        %628 = vmax.xlane.f32.xlu0 %v609
        %v629 = vpop.xlane.xlu0 %628
        %630 = vmax.xlane.f32.xlu0 %v610
        %v631 = vpop.xlane.xlu0 %630
        %632 = vmax.xlane.f32.xlu0 %v611
        %v633 = vpop.xlane.xlu0 %632
        %634 = vmax.xlane.f32.xlu0 %v612
        %v635 = vpop.xlane.xlu0 %634
        %636 = vmax.xlane.f32.xlu0 %v613
        %v637 = vpop.xlane.xlu0 %636
        %638 = vmax.xlane.f32.xlu0 %v614
        %v639 = vpop.xlane.xlu0 %638
        %640 = vmax.xlane.f32.xlu0 %v615
        %v641 = vpop.xlane.xlu0 %640
        %642 = vmax.xlane.f32.xlu0 %v616
        %v643 = vpop.xlane.xlu0 %642
        %644 = vmax.xlane.f32.xlu0 %v617
        %v645 = vpop.xlane.xlu0 %644
        %646 = vmax.xlane.f32.xlu0 %v618
        %v647 = vpop.xlane.xlu0 %646
        %648 = vmax.xlane.f32.xlu0 %v619
        %v649 = vpop.xlane.xlu0 %648
        %650 = vmax.xlane.f32.xlu0 %v620
        %v651 = vpop.xlane.xlu0 %650
        %652 = vmax.xlane.f32.xlu0 %v621
        %v653 = vpop.xlane.xlu0 %652
        %v654 = vsub.f32 %v606, %v623
        %v655 = vsub.f32 %v607, %v625
        %v656 = vsub.f32 %v608, %v627
        %v657 = vsub.f32 %v609, %v629
        %v658 = vsub.f32 %v610, %v631
        %v659 = vsub.f32 %v611, %v633
        %v660 = vsub.f32 %v612, %v635
        %v661 = vsub.f32 %v613, %v637
        %v662 = vsub.f32 %v614, %v639
        %v663 = vsub.f32 %v615, %v641
        %v664 = vsub.f32 %v616, %v643
        %v665 = vsub.f32 %v617, %v645
        %v666 = vsub.f32 %v618, %v647
        %v667 = vsub.f32 %v619, %v649
        %v668 = vsub.f32 %v620, %v651
        %v669 = vsub.f32 %v621, %v653
        %v670 = vmul.f32 %v654, 1.442695
        %v671 = vpow.pop %v670
        %v672 = vmul.f32 %v655, 1.442695
        %v673 = vpow.pop %v672
        %v674 = vmul.f32 %v656, 1.442695
        %v675 = vpow.pop %v674
        %v676 = vmul.f32 %v657, 1.442695
        %v677 = vpow.pop %v676
        %v678 = vmul.f32 %v658, 1.442695
        %v679 = vpow.pop %v678
        %v680 = vmul.f32 %v659, 1.442695
        %v681 = vpow.pop %v680
        %v682 = vmul.f32 %v660, 1.442695
        %v683 = vpow.pop %v682
        %v684 = vmul.f32 %v661, 1.442695
        %v685 = vpow.pop %v684
        %v686 = vmul.f32 %v662, 1.442695
        %v687 = vpow.pop %v686
        %v688 = vmul.f32 %v663, 1.442695
        %v689 = vpow.pop %v688
        %v690 = vmul.f32 %v664, 1.442695
        %v691 = vpow.pop %v690
        %v692 = vmul.f32 %v665, 1.442695
        %v693 = vpow.pop %v692
        %v694 = vmul.f32 %v666, 1.442695
        %v695 = vpow.pop %v694
        %v696 = vmul.f32 %v667, 1.442695
        %v697 = vpow.pop %v696
        %v698 = vmul.f32 %v668, 1.442695
        %v699 = vpow.pop %v698
        %v700 = vmul.f32 %v669, 1.442695
        %v701 = vpow.pop %v700
        %702 = vadd.xlane.f32.xlu0 %v671
        %v703 = vpop.xlane.xlu0 %702
        %704 = vadd.xlane.f32.xlu0 %v673
        %v705 = vpop.xlane.xlu0 %704
        %706 = vadd.xlane.f32.xlu0 %v675
        %v707 = vpop.xlane.xlu0 %706
        %708 = vadd.xlane.f32.xlu0 %v677
        %v709 = vpop.xlane.xlu0 %708
        %710 = vadd.xlane.f32.xlu0 %v679
        %v711 = vpop.xlane.xlu0 %710
        %712 = vadd.xlane.f32.xlu0 %v681
        %v713 = vpop.xlane.xlu0 %712
        %714 = vadd.xlane.f32.xlu0 %v683
        %v715 = vpop.xlane.xlu0 %714
        %716 = vadd.xlane.f32.xlu0 %v685
        %v717 = vpop.xlane.xlu0 %716
        %718 = vadd.xlane.f32.xlu0 %v687
        %v719 = vpop.xlane.xlu0 %718
        %720 = vadd.xlane.f32.xlu0 %v689
        %v721 = vpop.xlane.xlu0 %720
        %722 = vadd.xlane.f32.xlu0 %v691
        %v723 = vpop.xlane.xlu0 %722
        %724 = vadd.xlane.f32.xlu0 %v693
        %v725 = vpop.xlane.xlu0 %724
        %726 = vadd.xlane.f32.xlu0 %v695
        %v727 = vpop.xlane.xlu0 %726
        %728 = vadd.xlane.f32.xlu0 %v697
        %v729 = vpop.xlane.xlu0 %728
        %730 = vadd.xlane.f32.xlu0 %v699
        %v731 = vpop.xlane.xlu0 %730
        %732 = vadd.xlane.f32.xlu0 %v701
        %v733 = vpop.xlane.xlu0 %732
        %v734 = vlog2.pop %v703
        %v735 = vmul.f32 %v734, 0.6931472
        %v736 = vlog2.pop %v705
        %v737 = vmul.f32 %v736, 0.6931472
        %v738 = vlog2.pop %v707
        %v739 = vmul.f32 %v738, 0.6931472
        %v740 = vlog2.pop %v709
        %v741 = vmul.f32 %v740, 0.6931472
        %v742 = vlog2.pop %v711
        %v743 = vmul.f32 %v742, 0.6931472
        %v744 = vlog2.pop %v713
        %v745 = vmul.f32 %v744, 0.6931472
        %v746 = vlog2.pop %v715
        %v747 = vmul.f32 %v746, 0.6931472
        %v748 = vlog2.pop %v717
        %v749 = vmul.f32 %v748, 0.6931472
        %v750 = vlog2.pop %v719
        %v751 = vmul.f32 %v750, 0.6931472
        %v752 = vlog2.pop %v721
        %v753 = vmul.f32 %v752, 0.6931472
        %v754 = vlog2.pop %v723
        %v755 = vmul.f32 %v754, 0.6931472
        %v756 = vlog2.pop %v725
        %v757 = vmul.f32 %v756, 0.6931472
        %v758 = vlog2.pop %v727
        %v759 = vmul.f32 %v758, 0.6931472
        %v760 = vlog2.pop %v729
        %v761 = vmul.f32 %v760, 0.6931472
        %v762 = vlog2.pop %v731
        %v763 = vmul.f32 %v762, 0.6931472
        %v764 = vlog2.pop %v733
        %v765 = vmul.f32 %v764, 0.6931472
        %v766 = vsub.f32 %v525, %v623
        %v767 = vsub.f32 %v528, %v625
        %v768 = vsub.f32 %v533, %v627
        %v769 = vsub.f32 %v536, %v629
        %v770 = vsub.f32 %v541, %v631
        %v771 = vsub.f32 %v544, %v633
        %v772 = vsub.f32 %v549, %v635
        %v773 = vsub.f32 %v552, %v637
        %v774 = vsub.f32 %v557, %v639
        %v775 = vsub.f32 %v560, %v641
        %v776 = vsub.f32 %v565, %v643
        %v777 = vsub.f32 %v568, %v645
        %v778 = vsub.f32 %v573, %v647
        %v779 = vsub.f32 %v576, %v649
        %v780 = vsub.f32 %v581, %v651
        %v781 = vsub.f32 %v584, %v653
        %v782 = vsub.f32 %v766, %v735
        %v783 = vsub.f32 %v767, %v737
        %v784 = vsub.f32 %v768, %v739
        %v785 = vsub.f32 %v769, %v741
        %v786 = vsub.f32 %v770, %v743
        %v787 = vsub.f32 %v771, %v745
        %v788 = vsub.f32 %v772, %v747
        %v789 = vsub.f32 %v773, %v749
        %v790 = vsub.f32 %v774, %v751
        %v791 = vsub.f32 %v775, %v753
        %v792 = vsub.f32 %v776, %v755
        %v793 = vsub.f32 %v777, %v757
        %v794 = vsub.f32 %v778, %v759
        %v795 = vsub.f32 %v779, %v761
        %v796 = vsub.f32 %v780, %v763
        %v797 = vsub.f32 %v781, %v765
        %v798 = vsel %vm605, %v782, 0.0
        %v799 = vsel %vm605, %v783, 0.0
        %v800 = vsel %vm605, %v784, 0.0
        %v801 = vsel %vm605, %v785, 0.0
        %v802 = vsel %vm605, %v786, 0.0
        %v803 = vsel %vm605, %v787, 0.0
        %v804 = vsel %vm605, %v788, 0.0
        %v805 = vsel %vm605, %v789, 0.0
        %v806 = vsel %vm605, %v790, 0.0
        %v807 = vsel %vm605, %v791, 0.0
        %v808 = vsel %vm605, %v792, 0.0
        %v809 = vsel %vm605, %v793, 0.0
        %v810 = vsel %vm605, %v794, 0.0
        %v811 = vsel %vm605, %v795, 0.0
        %v812 = vsel %vm605, %v796, 0.0
        %v813 = vsel %vm605, %v797, 0.0
        %814 = vst [vmem:[%s254] sm:$0xff] %v798
        %815 = vst [vmem:[%s254 + $0x8] sm:$0xff] %v799
        %816 = vst [vmem:[%s254 + $0x10] sm:$0xff] %v800
        %817 = vst [vmem:[%s254 + $0x18] sm:$0xff] %v801
        %818 = vst [vmem:[%s254 + $0x20] sm:$0xff] %v802
        %819 = vst [vmem:[%s254 + $0x28] sm:$0xff] %v803
        %820 = vst [vmem:[%s254 + $0x30] sm:$0xff] %v804
        %821 = vst [vmem:[%s254 + $0x38] sm:$0xff] %v805
        %822 = vst [vmem:[%s254 + $0x40] sm:$0xff] %v806
        %823 = vst [vmem:[%s254 + $0x48] sm:$0xff] %v807
        %824 = vst [vmem:[%s254 + $0x50] sm:$0xff] %v808
        %825 = vst [vmem:[%s254 + $0x58] sm:$0xff] %v809
        %826 = vst [vmem:[%s254 + $0x60] sm:$0xff] %v810
        %827 = vst [vmem:[%s254 + $0x68] sm:$0xff] %v811
        %828 = vst [vmem:[%s254 + $0x70] sm:$0xff] %v812
        %829 = vst [vmem:[%s254 + $0x78] sm:$0xff] %v813
        %s830 = sand.u32 %s102, 1
        %s831 = scalar_lea.sflag [#allocation4], %s830
        %s832 = sand.u32 %s102, 1
        %s833 = smul.addr %s832, 128
        %s834 = scalar_lea.vmem [#allocation8], %s833
        %s835 = sand.u32 %s128, 1
        %s836 = scalar_lea.sflag [#allocation10], %s835
        %s837 = sand.u32 %s128, 1
        %s838 = smul.addr %s837, 128
        %s839 = scalar_lea.vmem [#allocation9], %s838
        // Predicated region
        $region45: #{gcn_forward.3} parent=31 // pred_check
          %p840 = pneg %p112
        $region46: #{gcn_forward.3} parent=31 // pred_check_branch
          %842 = sbr.rel (%p840) target = $region48
        $region47: #{gcn_forward.3} parent=31 // pred_region
          %s843 = smul.u32 16, %s26
          %s845 = ssub.s32 2048, 2048
          %846 = vsyncadd %s831, %s845
          %s847 = smul.addr %s843, 128
          %s848 = scalar_lea.hbm %s3, %s847
          %s849 = sshll.u32 %s834, 4
          %s850 = int_to_ptr.vmem [resolvable:$true] %s849
          %855 = dma.vmem_to_hbm [thread:$0]  %s850, 2048, %s848, %s831, 128, 128, 8
        $region48: #{gcn_forward.3} parent=31 // pred_fallthru
          _
        // Predicated region
        $region49: #{gcn_forward.3} parent=31 // pred_check
          %p856 = pneg %p138
        $region50: #{gcn_forward.3} parent=31 // pred_check_branch
          %858 = sbr.rel (%p856) target = $region52
        $region51: #{gcn_forward.3} parent=31 // pred_region
          %s859 = smul.u32 16, %s26
          %s861 = ssub.s32 2048, 2048
          %862 = vsyncadd %s836, %s861
          %s863 = smul.addr %s859, 128
          %s864 = scalar_lea.hbm %s4, %s863
          %s865 = sshll.u32 %s839, 4
          %s866 = int_to_ptr.vmem [resolvable:$true] %s865
          %871 = dma.vmem_to_hbm [thread:$0]  %s866, 2048, %s864, %s836, 128, 128, 8
        $region52: #{gcn_forward.3} parent=31 // pred_fallthru
          _
      $region32: #{gcn_forward.3} parent=5 // pred_fallthru
        _
      %p872 = scmp.le.s32.totalorder 2, %s21
      // Predicated region
      $region53: #{gcn_forward.3} parent=5 // pred_check
        %p873 = pneg %p872
      $region54: #{gcn_forward.3} parent=5 // pred_check_branch
        %875 = sbr.rel (%p873) target = $region56
      $region55: #{gcn_forward.3} parent=5 // pred_region
        %s876 = ssub.s32 %s21, 2
        // Predicated region
        $region57: #{gcn_forward.3} parent=55 // pred_check
          %p877 = pneg %p118
        $region58: #{gcn_forward.3} parent=55 // pred_check_branch
          %879 = sbr.rel (%p877) target = $region60
        $region59: #{gcn_forward.3} parent=55 // pred_region
          %s880 = sand.u32 %s103, 1
          %s881 = scalar_lea.sflag [#allocation4], %s880
          %s882 = sand.u32 %s103, 1
          %s883 = smul.addr %s882, 128
          %s884 = scalar_lea.vmem [#allocation8], %s883
          %885 = dma.done %s881, 2048
        $region60: #{gcn_forward.3} parent=55 // pred_fallthru
          _
        // Predicated region
        $region61: #{gcn_forward.3} parent=55 // pred_check
          %p886 = pneg %p144
        $region62: #{gcn_forward.3} parent=55 // pred_check_branch
          %888 = sbr.rel (%p886) target = $region64
        $region63: #{gcn_forward.3} parent=55 // pred_region
          %s889 = sand.u32 %s129, 1
          %s890 = scalar_lea.sflag [#allocation10], %s889
          %s891 = sand.u32 %s129, 1
          %s892 = smul.addr %s891, 128
          %s893 = scalar_lea.vmem [#allocation9], %s892
          %894 = dma.done %s890, 2048
        $region64: #{gcn_forward.3} parent=55 // pred_fallthru
          _
      $region56: #{gcn_forward.3} parent=5 // pred_fallthru
        _
    $region6: #{gcn_forward.3} parent=1 // loop_footer
      %s25 = sadd.s32 1, %s21
    $region7: #{gcn_forward.3} parent=1 // loop_footer_branch
      %20 = sbr.rel target = $region3
    $region8: #{gcn_forward.3} parent=1 // loop_exit
      _
    %895 = vsyncpa [#allocation3], 1
    %s896 = scalar_lea.sflag [#allocation3], 1
    %897 = vsyncpa %s896, 1
    %898 = vsyncpa [#allocation6], 1
    %899 = vsyncpa [#allocation4], 1
    %s900 = scalar_lea.sflag [#allocation4], 1
    %901 = vsyncpa %s900, 1
    %902 = vsyncpa [#allocation10], 1
    %s903 = scalar_lea.sflag [#allocation10], 1
    %904 = vsyncpa %s903, 1

// kernel: gcn_forward.2
$region0: #{gcn_forward.2}
  #allocation0 [shape = 'u32[]', space=smem, size = 0x4, offset = 0x4, fixed_abs, tag = 'smem constant byte address 0x4 - core index']
  #allocation1 [shape = 'u32[144,128]{1,0:T(1,128)}', space=vmem, size = 0x12000, scoped, tag = 'internal scratch']
  %s0 = inlined_call_operand.hbm [shape: bf16[256,256], index: 0, kind: input, shape index: {}]
  %s1 = inlined_call_operand.hbm [shape: bf16[256,128], index: 1, kind: input, shape index: {}]
  %s2 = inlined_call_operand.hbm [shape: bf16[128,128], index: 2, kind: input, shape index: {}]
  %s3 = inlined_call_operand.hbm [shape: f32[1,128], index: 3, kind: input, shape index: {}]
  %s4 = inlined_call_operand.hbm [shape: bf16[128,128], index: 4, kind: input, shape index: {}]
  %s5 = inlined_call_operand.hbm [shape: bf16[256,128], index: 5, kind: output, shape index: {}]
  %s6 = sld [smem:[#allocation0]]
  $region73: #{gcn_forward.2} parent=0
    _
  %s8 = ssub.s32 1, %s6
  %s9 = scalar_select 0, %s8, %s6
  $region1: #{gcn_forward.2} parent=0
    #allocation2 [shape = 'u8[131072]{0}', space=vmem, size = 0x20000, scoped, tag = 'input window, operand 0']
    #allocation3 [shape = 's32[2]{0}', space=sflag, size = 0x8, scoped, tag = 'scoped memory for gcn_forward.2']
    #allocation4 [shape = 's32[2]{0}', space=sflag, size = 0x8, scoped, tag = 'scoped memory for gcn_forward.2']
    #allocation5 [shape = 'u8[65536]{0}', space=vmem, size = 0x10000, scoped, tag = 'input window, operand 1, single buffered']
    #allocation6 [shape = 's32[1]{0}', space=sflag, size = 0x4, scoped, tag = 'scoped memory for gcn_forward.2']
    #allocation7 [shape = 'u8[32768]{0}', space=vmem, size = 0x8000, scoped, tag = 'input window, operand 2, single buffered']
    #allocation8 [shape = 'u8[512]{0}', space=vmem, size = 0x400, scoped, tag = 'input window, operand 3, single buffered']
    #allocation9 [shape = 's32[1]{0}', space=sflag, size = 0x4, scoped, tag = 'scoped memory for gcn_forward.2']
    #allocation10 [shape = 'u8[32768]{0}', space=vmem, size = 0x8000, scoped, tag = 'input window, operand 4, single buffered']
    #allocation11 [shape = 'u8[65536]{0}', space=vmem, size = 0x10000, scoped, tag = 'output window, operand 0']
    %10 = vsyncpa [#allocation3], 0
    %s11 = scalar_lea.sflag [#allocation3], 1
    %12 = vsyncpa %s11, 0
    %13 = vsyncpa [#allocation6], 0
    %14 = vsyncpa [#allocation9], 0
    %15 = vsyncpa [#allocation4], 0
    %s16 = scalar_lea.sflag [#allocation4], 1
    %17 = vsyncpa %s16, 0
    loop: start=0, step=1, limit=4
    $region2: #{gcn_forward.2} parent=1 // loop_pre_header
      _
    $region3: #{gcn_forward.2} parent=1 // loop_header
      %s19 = sphi 0, %s23
      %p20 = scmp.ge.s32.totalorder %s19, 4
      %s29 = sphi 0, %s31
      %s32 = sphi 0, %s29
      %s33 = sphi 0, %s32
      %s49 = sphi 0, %s33
      %s53 = sphi 0, %s53
      %s55 = sphi 0, %s53
      %s56 = sphi 0, %s55
      %s70 = sphi 0, %s56
      %s74 = sphi 0, %s74
      %s76 = sphi 0, %s74
      %s77 = sphi 0, %s76
      %s91 = sphi 0, %s77
      %s95 = sphi 0, %s95
      %s97 = sphi 0, %s95
      %s98 = sphi 0, %s97
      %s112 = sphi 0, %s98
      %s116 = sphi 0, %s116
      %s118 = sphi 0, %s116
      %s119 = sphi 0, %s118
      %s133 = sphi 0, %s119
      %s139 = sphi 0, %s141
      %s142 = sphi 0, %s139
      %s143 = sphi 0, %s142
      %s159 = sphi 0, %s143
    $region4: #{gcn_forward.2} parent=1 // loop_header_branch
      %22 = sbr.rel (%p20) target = $region8
    $region5: #{gcn_forward.2} parent=1 // loop_body
      %s24 = ssub.s32 %s19, 1
      %s25 = ssub.s32 %s19, 2
      %s26 = sadd.s32 %s19, 1
      %s27 = ssub.s32 %s19, %s26
      %p28 = scmp.eq.s32.totalorder %s27, 0
      %s30 = sadd.s32 %s29, 1
      %s31 = scalar_select %p28, %s29, %s30
      %p34 = pneg %p28
      %p35 = scmp.eq.s32.totalorder %s19, 1
      %p36 = por %p34, %p35
      %p37 = scmp.ne.s32.totalorder %s29, %s32
      %p38 = scmp.eq.s32.totalorder %s19, 0
      %p39 = por %p37, %p38
      %p40 = scmp.ne.s32.totalorder %s29, %s32
      %p41 = scmp.eq.s32.totalorder %s24, 1
      %p42 = por %p40, %p41
      %p43 = scmp.ne.s32.totalorder %s32, %s33
      %p44 = scmp.eq.s32.totalorder %s24, 0
      %p45 = por %p43, %p44
      %p46 = scmp.ne.s32.totalorder %s32, %s33
      %p47 = scmp.eq.s32.totalorder %s25, 1
      %p48 = por %p46, %p47
      %p50 = scmp.ne.s32.totalorder %s33, %s49
      %p51 = scmp.eq.s32.totalorder %s25, 0
      %p52 = por %p50, %p51
      %s54 = sadd.s32 %s53, 1
      %p57 = scmp.eq.s32.totalorder %s19, 1
      %p58 = scmp.ne.s32.totalorder %s53, %s55
      %p59 = scmp.eq.s32.totalorder %s19, 0
      %p60 = por %p58, %p59
      %p61 = scmp.ne.s32.totalorder %s53, %s55
      %p62 = scmp.eq.s32.totalorder %s24, 1
      %p63 = por %p61, %p62
      %p64 = scmp.ne.s32.totalorder %s55, %s56
      %p65 = scmp.eq.s32.totalorder %s24, 0
      %p66 = por %p64, %p65
      %p67 = scmp.ne.s32.totalorder %s55, %s56
      %p68 = scmp.eq.s32.totalorder %s25, 1
      %p69 = por %p67, %p68
      %p71 = scmp.ne.s32.totalorder %s56, %s70
      %p72 = scmp.eq.s32.totalorder %s25, 0
      %p73 = por %p71, %p72
      %s75 = sadd.s32 %s74, 1
      %p78 = scmp.eq.s32.totalorder %s19, 1
      %p79 = scmp.ne.s32.totalorder %s74, %s76
      %p80 = scmp.eq.s32.totalorder %s19, 0
      %p81 = por %p79, %p80
      %p82 = scmp.ne.s32.totalorder %s74, %s76
      %p83 = scmp.eq.s32.totalorder %s24, 1
      %p84 = por %p82, %p83
      %p85 = scmp.ne.s32.totalorder %s76, %s77
      %p86 = scmp.eq.s32.totalorder %s24, 0
      %p87 = por %p85, %p86
      %p88 = scmp.ne.s32.totalorder %s76, %s77
      %p89 = scmp.eq.s32.totalorder %s25, 1
      %p90 = por %p88, %p89
      %p92 = scmp.ne.s32.totalorder %s77, %s91
      %p93 = scmp.eq.s32.totalorder %s25, 0
      %p94 = por %p92, %p93
      %s96 = sadd.s32 %s95, 1
      %p99 = scmp.eq.s32.totalorder %s19, 1
      %p100 = scmp.ne.s32.totalorder %s95, %s97
      %p101 = scmp.eq.s32.totalorder %s19, 0
      %p102 = por %p100, %p101
      %p103 = scmp.ne.s32.totalorder %s95, %s97
      %p104 = scmp.eq.s32.totalorder %s24, 1
      %p105 = por %p103, %p104
      %p106 = scmp.ne.s32.totalorder %s97, %s98
      %p107 = scmp.eq.s32.totalorder %s24, 0
      %p108 = por %p106, %p107
      %p109 = scmp.ne.s32.totalorder %s97, %s98
      %p110 = scmp.eq.s32.totalorder %s25, 1
      %p111 = por %p109, %p110
      %p113 = scmp.ne.s32.totalorder %s98, %s112
      %p114 = scmp.eq.s32.totalorder %s25, 0
      %p115 = por %p113, %p114
      %s117 = sadd.s32 %s116, 1
      %p120 = scmp.eq.s32.totalorder %s19, 1
      %p121 = scmp.ne.s32.totalorder %s116, %s118
      %p122 = scmp.eq.s32.totalorder %s19, 0
      %p123 = por %p121, %p122
      %p124 = scmp.ne.s32.totalorder %s116, %s118
      %p125 = scmp.eq.s32.totalorder %s24, 1
      %p126 = por %p124, %p125
      %p127 = scmp.ne.s32.totalorder %s118, %s119
      %p128 = scmp.eq.s32.totalorder %s24, 0
      %p129 = por %p127, %p128
      %p130 = scmp.ne.s32.totalorder %s118, %s119
      %p131 = scmp.eq.s32.totalorder %s25, 1
      %p132 = por %p130, %p131
      %p134 = scmp.ne.s32.totalorder %s119, %s133
      %p135 = scmp.eq.s32.totalorder %s25, 0
      %p136 = por %p134, %p135
      %s137 = ssub.s32 %s19, %s26
      %p138 = scmp.eq.s32.totalorder %s137, 0
      %s140 = sadd.s32 %s139, 1
      %s141 = scalar_select %p138, %s139, %s140
      %p144 = pneg %p138
      %p145 = scmp.eq.s32.totalorder %s19, 1
      %p146 = por %p144, %p145
      %p147 = scmp.ne.s32.totalorder %s139, %s142
      %p148 = scmp.eq.s32.totalorder %s19, 0
      %p149 = por %p147, %p148
      %p150 = scmp.ne.s32.totalorder %s139, %s142
      %p151 = scmp.eq.s32.totalorder %s24, 1
      %p152 = por %p150, %p151
      %p153 = scmp.ne.s32.totalorder %s142, %s143
      %p154 = scmp.eq.s32.totalorder %s24, 0
      %p155 = por %p153, %p154
      %p156 = scmp.ne.s32.totalorder %s142, %s143
      %p157 = scmp.eq.s32.totalorder %s25, 1
      %p158 = por %p156, %p157
      %p160 = scmp.ne.s32.totalorder %s143, %s159
      %p161 = scmp.eq.s32.totalorder %s25, 0
      %p162 = por %p160, %p161
      %p163 = scmp.le.s32.totalorder 1, %s19
      %p164 = scmp.lt.s32.totalorder %s19, 3
      %p165 = pnand %p163, %p164
      %p166 = pneg %p165
      // Predicated region
      $region9: #{gcn_forward.2} parent=5 // pred_check
        _
      $region10: #{gcn_forward.2} parent=5 // pred_check_branch
        %168 = sbr.rel (%p165) target = $region12
      $region11: #{gcn_forward.2} parent=5 // pred_region
        %s169 = ssub.s32 %s19, 1
        // Predicated region
        $region13: #{gcn_forward.2} parent=11 // pred_check
          %p170 = pneg %p66
        $region14: #{gcn_forward.2} parent=11 // pred_check_branch
          %172 = sbr.rel (%p170) target = $region16
        $region15: #{gcn_forward.2} parent=11 // pred_region
          %s174 = ssub.s32 2048, 2048
          %175 = vsyncadd [#allocation6], %s174
          %s176 = sshll.u32 [#allocation5], 4
          %s177 = int_to_ptr.vmem [resolvable:$true] %s176
          %182 = dma.hbm_to_vmem [thread:$0]  %s1, 2048, %s177, [#allocation6], 64, 64, 4
        $region16: #{gcn_forward.2} parent=11 // pred_fallthru
          _
        // Predicated region
        $region17: #{gcn_forward.2} parent=11 // pred_check
          %p183 = pneg %p87
        $region18: #{gcn_forward.2} parent=11 // pred_check_branch
          %185 = sbr.rel (%p183) target = $region20
        $region19: #{gcn_forward.2} parent=11 // pred_region
          %s187 = ssub.s32 1024, 1024
          %188 = vsyncadd [#allocation6], %s187
          %s189 = sshll.u32 [#allocation7], 4
          %s190 = int_to_ptr.vmem [resolvable:$true] %s189
          %195 = dma.hbm_to_vmem [thread:$0]  %s2, 1024, %s190, [#allocation6], 64, 64, 4
        $region20: #{gcn_forward.2} parent=11 // pred_fallthru
          _
        // Predicated region
        $region21: #{gcn_forward.2} parent=11 // pred_check
          %p196 = pneg %p108
        $region22: #{gcn_forward.2} parent=11 // pred_check_branch
          %198 = sbr.rel (%p196) target = $region24
        $region23: #{gcn_forward.2} parent=11 // pred_region
          %s200 = ssub.s32 16, 16
          %201 = vsyncadd [#allocation9], %s200
          %s203 = sshll.u32 [#allocation8], 4
          %s204 = int_to_ptr.vmem [resolvable:$true] %s203
          %206 = dma.hbm_to_vmem [thread:$0]  %s3, 16, %s204, [#allocation9]
        $region24: #{gcn_forward.2} parent=11 // pred_fallthru
          _
        // Predicated region
        $region25: #{gcn_forward.2} parent=11 // pred_check
          %p207 = pneg %p129
        $region26: #{gcn_forward.2} parent=11 // pred_check_branch
          %209 = sbr.rel (%p207) target = $region28
        $region27: #{gcn_forward.2} parent=11 // pred_region
          %s211 = ssub.s32 1024, 1024
          %212 = vsyncadd [#allocation9], %s211
          %s213 = sshll.u32 [#allocation10], 4
          %s214 = int_to_ptr.vmem [resolvable:$true] %s213
          %219 = dma.hbm_to_vmem [thread:$0]  %s4, 1024, %s214, [#allocation9], 64, 64, 4
        $region28: #{gcn_forward.2} parent=11 // pred_fallthru
          _
      $region12: #{gcn_forward.2} parent=5 // pred_fallthru
        _
      %p220 = scmp.lt.s32.totalorder %s19, 2
      // Predicated region
      $region29: #{gcn_forward.2} parent=5 // pred_check
        %p221 = pneg %p220
      $region30: #{gcn_forward.2} parent=5 // pred_check_branch
        %223 = sbr.rel (%p221) target = $region32
      $region31: #{gcn_forward.2} parent=5 // pred_region
        // Predicated region
        $region33: #{gcn_forward.2} parent=31 // pred_check
          %p224 = pneg %p39
        $region34: #{gcn_forward.2} parent=31 // pred_check_branch
          %226 = sbr.rel (%p224) target = $region36
        $region35: #{gcn_forward.2} parent=31 // pred_region
          %s227 = sand.u32 %s29, 1
          %s228 = scalar_lea.sflag [#allocation3], %s227
          %s229 = sand.u32 %s29, 1
          %s230 = smul.addr %s229, 128
          %s231 = scalar_lea.vmem [#allocation2], %s230
          %s232 = smul.u32 16, %s19
          %s234 = ssub.s32 2048, 2048
          %235 = vsyncadd %s228, %s234
          %s236 = smul.addr %s232, 2
          %s237 = smul.addr %s236, 64
          %s238 = scalar_lea.hbm %s0, %s237
          %s239 = sshll.u32 %s231, 4
          %s240 = int_to_ptr.vmem [resolvable:$true] %s239
          %245 = dma.hbm_to_vmem [thread:$0]  %s238, 2048, %s240, %s228, 128, 128, 8
        $region36: #{gcn_forward.2} parent=31 // pred_fallthru
          _
      $region32: #{gcn_forward.2} parent=5 // pred_fallthru
        _
      %p246 = scmp.le.s32.totalorder 1, %s19
      %p247 = scmp.lt.s32.totalorder %s19, 3
      %p248 = pnand %p246, %p247
      %p249 = pneg %p248
      // Predicated region
      $region37: #{gcn_forward.2} parent=5 // pred_check
        _
      $region38: #{gcn_forward.2} parent=5 // pred_check_branch
        %251 = sbr.rel (%p248) target = $region40
      $region39: #{gcn_forward.2} parent=5 // pred_region
        %s252 = ssub.s32 %s19, 1
        %s253 = sand.u32 %s32, 1
        %s254 = scalar_lea.sflag [#allocation3], %s253
        %s255 = sand.u32 %s32, 1
        %s256 = smul.addr %s255, 128
        %s257 = scalar_lea.vmem [#allocation2], %s256
        // Predicated region
        $region41: #{gcn_forward.2} parent=39 // pred_check
          %p258 = pneg %p45
        $region42: #{gcn_forward.2} parent=39 // pred_check_branch
          %260 = sbr.rel (%p258) target = $region44
        $region43: #{gcn_forward.2} parent=39 // pred_region
          %261 = dma.done %s254, 2048
        $region44: #{gcn_forward.2} parent=39 // pred_fallthru
          _
        // Predicated region
        $region45: #{gcn_forward.2} parent=39 // pred_check
          %p262 = pneg %p66
        $region46: #{gcn_forward.2} parent=39 // pred_check_branch
          %264 = sbr.rel (%p262) target = $region48
        $region47: #{gcn_forward.2} parent=39 // pred_region
          %265 = dma.done [#allocation6], 2048
        $region48: #{gcn_forward.2} parent=39 // pred_fallthru
          _
        // Predicated region
        $region49: #{gcn_forward.2} parent=39 // pred_check
          %p266 = pneg %p87
        $region50: #{gcn_forward.2} parent=39 // pred_check_branch
          %268 = sbr.rel (%p266) target = $region52
        $region51: #{gcn_forward.2} parent=39 // pred_region
          %269 = dma.done [#allocation6], 1024
        $region52: #{gcn_forward.2} parent=39 // pred_fallthru
          _
        // Predicated region
        $region53: #{gcn_forward.2} parent=39 // pred_check
          %p270 = pneg %p108
        $region54: #{gcn_forward.2} parent=39 // pred_check_branch
          %272 = sbr.rel (%p270) target = $region56
        $region55: #{gcn_forward.2} parent=39 // pred_region
          %273 = dma.done [#allocation9], 16
        $region56: #{gcn_forward.2} parent=39 // pred_fallthru
          _
        // Predicated region
        $region57: #{gcn_forward.2} parent=39 // pred_check
          %p274 = pneg %p129
        $region58: #{gcn_forward.2} parent=39 // pred_check_branch
          %276 = sbr.rel (%p274) target = $region60
        $region59: #{gcn_forward.2} parent=39 // pred_region
          %277 = dma.done [#allocation9], 1024
        $region60: #{gcn_forward.2} parent=39 // pred_fallthru
          _
        %s278 = sand.u32 %s32, 1
        %s279 = scalar_lea.sflag [#allocation3], %s278
        %s280 = sand.u32 %s32, 1
        %s281 = smul.addr %s280, 128
        %s282 = scalar_lea.vmem [#allocation2], %s281
        %p283 = pneg %p45
        %p284 = pneg %p42
        %p285 = pneg %p66
        %p286 = pneg %p63
        %p287 = pneg %p87
        %p288 = pneg %p84
        %p289 = pneg %p108
        %p290 = pneg %p105
        %p291 = pneg %p129
        %p292 = pneg %p126
        %p293 = pneg %p155
        %p294 = pneg %p152
        %s295 = sand.u32 %s142, 1
        %s296 = scalar_lea.sflag [#allocation4], %s295
        %s297 = sand.u32 %s142, 1
        %s298 = smul.addr %s297, 64
        %s299 = scalar_lea.vmem [#allocation11], %s298
        %s300 = smul.u32 16, %s24
        %s301 = smul.u32 16, %s24
        %v303 = vld [vmem:[%s257] sm:$0xff]
        %v304 = vld [vmem:[%s257 + $0x8] sm:$0xff]
        %v305 = vld [vmem:[%s257 + $0x10] sm:$0xff]
        %v306 = vld [vmem:[%s257 + $0x18] sm:$0xff]
        %v307 = vld [vmem:[%s257 + $0x20] sm:$0xff]
        %v308 = vld [vmem:[%s257 + $0x28] sm:$0xff]
        %v309 = vld [vmem:[%s257 + $0x30] sm:$0xff]
        %v310 = vld [vmem:[%s257 + $0x38] sm:$0xff]
        %v311 = vld [vmem:[%s257 + $0x40] sm:$0xff]
        %v312 = vld [vmem:[%s257 + $0x48] sm:$0xff]
        %v313 = vld [vmem:[%s257 + $0x50] sm:$0xff]
        %v314 = vld [vmem:[%s257 + $0x58] sm:$0xff]
        %v315 = vld [vmem:[%s257 + $0x60] sm:$0xff]
        %v316 = vld [vmem:[%s257 + $0x68] sm:$0xff]
        %v317 = vld [vmem:[%s257 + $0x70] sm:$0xff]
        %v318 = vld [vmem:[%s257 + $0x78] sm:$0xff]
        %v319 = vld [vmem:[#allocation5] sm:$0xf]
        %v320 = vld [vmem:[#allocation5 + $0x4] sm:$0xf]
        %v321 = vld [vmem:[#allocation5 + $0x8] sm:$0xf]
        %v322 = vld [vmem:[#allocation5 + $0xc] sm:$0xf]
        %v323 = vld [vmem:[#allocation5 + $0x10] sm:$0xf]
        %v324 = vld [vmem:[#allocation5 + $0x14] sm:$0xf]
        %v325 = vld [vmem:[#allocation5 + $0x18] sm:$0xf]
        %v326 = vld [vmem:[#allocation5 + $0x1c] sm:$0xf]
        %v327 = vld [vmem:[#allocation5 + $0x20] sm:$0xf]
        %v328 = vld [vmem:[#allocation5 + $0x24] sm:$0xf]
        %v329 = vld [vmem:[#allocation5 + $0x28] sm:$0xf]
        %v330 = vld [vmem:[#allocation5 + $0x2c] sm:$0xf]
        %v331 = vld [vmem:[#allocation5 + $0x30] sm:$0xf]
        %v332 = vld [vmem:[#allocation5 + $0x34] sm:$0xf]
        %v333 = vld [vmem:[#allocation5 + $0x38] sm:$0xf]
        %v334 = vld [vmem:[#allocation5 + $0x3c] sm:$0xf]
        %v335 = vld [vmem:[#allocation5 + $0x40] sm:$0xf]
        %v336 = vld [vmem:[#allocation5 + $0x44] sm:$0xf]
        %v337 = vld [vmem:[#allocation5 + $0x48] sm:$0xf]
        %v338 = vld [vmem:[#allocation5 + $0x4c] sm:$0xf]
        %v339 = vld [vmem:[#allocation5 + $0x50] sm:$0xf]
        %v340 = vld [vmem:[#allocation5 + $0x54] sm:$0xf]
        %v341 = vld [vmem:[#allocation5 + $0x58] sm:$0xf]
        %v342 = vld [vmem:[#allocation5 + $0x5c] sm:$0xf]
        %v343 = vld [vmem:[#allocation5 + $0x60] sm:$0xf]
        %v344 = vld [vmem:[#allocation5 + $0x64] sm:$0xf]
        %v345 = vld [vmem:[#allocation5 + $0x68] sm:$0xf]
        %v346 = vld [vmem:[#allocation5 + $0x6c] sm:$0xf]
        %v347 = vld [vmem:[#allocation5 + $0x70] sm:$0xf]
        %v348 = vld [vmem:[#allocation5 + $0x74] sm:$0xf]
        %v349 = vld [vmem:[#allocation5 + $0x78] sm:$0xf]
        %v350 = vld [vmem:[#allocation5 + $0x7c] sm:$0xf]
        %v367 = vunpack.c.l.b16 %v303
        %v368 = vunpack.c.h.b16 %v303
        %v369 = vunpack.c.l.b16 %v304
        %v370 = vunpack.c.h.b16 %v304
        %v371 = vunpack.c.l.b16 %v305
        %v372 = vunpack.c.h.b16 %v305
        %v373 = vunpack.c.l.b16 %v306
        %v374 = vunpack.c.h.b16 %v306
        %v375 = vunpack.c.l.b16 %v307
        %v376 = vunpack.c.h.b16 %v307
        %v377 = vunpack.c.l.b16 %v308
        %v378 = vunpack.c.h.b16 %v308
        %v379 = vunpack.c.l.b16 %v309
        %v380 = vunpack.c.h.b16 %v309
        %v381 = vunpack.c.l.b16 %v310
        %v382 = vunpack.c.h.b16 %v310
        %v383 = vunpack.c.l.b16 %v311
        %v384 = vunpack.c.h.b16 %v311
        %v385 = vunpack.c.l.b16 %v312
        %v386 = vunpack.c.h.b16 %v312
        %v387 = vunpack.c.l.b16 %v313
        %v388 = vunpack.c.h.b16 %v313
        %v389 = vunpack.c.l.b16 %v314
        %v390 = vunpack.c.h.b16 %v314
        %v391 = vunpack.c.l.b16 %v315
        %v392 = vunpack.c.h.b16 %v315
        %v393 = vunpack.c.l.b16 %v316
        %v394 = vunpack.c.h.b16 %v316
        %v395 = vunpack.c.l.b16 %v317
        %v396 = vunpack.c.h.b16 %v317
        %v397 = vunpack.c.l.b16 %v318
        %v398 = vunpack.c.h.b16 %v318
        %v399 = vpack.c.b16 %v369, %v367
        %v400 = vpack.c.b16 %v370, %v368
        %v401 = vpack.c.b16 %v373, %v371
        %v402 = vpack.c.b16 %v374, %v372
        %v403 = vpack.c.b16 %v377, %v375
        %v404 = vpack.c.b16 %v378, %v376
        %v405 = vpack.c.b16 %v381, %v379
        %v406 = vpack.c.b16 %v382, %v380
        %v407 = vpack.c.b16 %v385, %v383
        %v408 = vpack.c.b16 %v386, %v384
        %v409 = vpack.c.b16 %v389, %v387
        %v410 = vpack.c.b16 %v390, %v388
        %v411 = vpack.c.b16 %v393, %v391
        %v412 = vpack.c.b16 %v394, %v392
        %v413 = vpack.c.b16 %v397, %v395
        %v414 = vpack.c.b16 %v398, %v396
        %v463 = vunpack.c.l.b16 %v319
        %v464 = vunpack.c.l.b16 %v320
        %v465 = vunpack.c.l.b16 %v321
        %v466 = vunpack.c.l.b16 %v322
        %v467 = vunpack.c.l.b16 %v323
        %v468 = vunpack.c.l.b16 %v324
        %v469 = vunpack.c.l.b16 %v325
        %v470 = vunpack.c.l.b16 %v326
        %v471 = vunpack.c.l.b16 %v327
        %v472 = vunpack.c.l.b16 %v328
        %v473 = vunpack.c.l.b16 %v329
        %v474 = vunpack.c.l.b16 %v330
        %v475 = vunpack.c.l.b16 %v331
        %v476 = vunpack.c.l.b16 %v332
        %v477 = vunpack.c.l.b16 %v333
        %v478 = vunpack.c.l.b16 %v334
        %v479 = vunpack.c.l.b16 %v335
        %v480 = vunpack.c.l.b16 %v336
        %v481 = vunpack.c.l.b16 %v337
        %v482 = vunpack.c.l.b16 %v338
        %v483 = vunpack.c.l.b16 %v339
        %v484 = vunpack.c.l.b16 %v340
        %v485 = vunpack.c.l.b16 %v341
        %v486 = vunpack.c.l.b16 %v342
        %v487 = vunpack.c.l.b16 %v343
        %v488 = vunpack.c.l.b16 %v344
        %v489 = vunpack.c.l.b16 %v345
        %v490 = vunpack.c.l.b16 %v346
        %v491 = vunpack.c.l.b16 %v347
        %v492 = vunpack.c.l.b16 %v348
        %v493 = vunpack.c.l.b16 %v349
        %v494 = vunpack.c.l.b16 %v350
        %v495 = vpack.c.b16 %v464, %v463
        %v496 = vpack.c.b16 %v466, %v465
        %v497 = vpack.c.b16 %v468, %v467
        %v498 = vpack.c.b16 %v470, %v469
        %v499 = vpack.c.b16 %v472, %v471
        %v500 = vpack.c.b16 %v474, %v473
        %v501 = vpack.c.b16 %v476, %v475
        %v502 = vpack.c.b16 %v478, %v477
        %v503 = vpack.c.b16 %v480, %v479
        %v504 = vpack.c.b16 %v482, %v481
        %v505 = vpack.c.b16 %v484, %v483
        %v506 = vpack.c.b16 %v486, %v485
        %v507 = vpack.c.b16 %v488, %v487
        %v508 = vpack.c.b16 %v490, %v489
        %v509 = vpack.c.b16 %v492, %v491
        %v510 = vpack.c.b16 %v494, %v493
        %527 = vmatprep.subr.bf16.mxu0 0
        %528 = vmatpush1.bf16.msra.mxu0 %v495
        %529 = vmatprep.subr.bf16.mxu0 0
        %530 = vmatpush1.bf16.msra.mxu0 %v496
        %531 = vmatprep.subr.bf16.mxu0 0
        %532 = vmatpush1.bf16.msra.mxu0 %v497
        %533 = vmatprep.subr.bf16.mxu0 0
        %534 = vmatpush1.bf16.msra.mxu0 %v498
        %535 = vmatprep.subr.bf16.mxu0 0
        %536 = vmatpush1.bf16.msra.mxu0 %v499
        %537 = vmatprep.subr.bf16.mxu0 0
        %538 = vmatpush1.bf16.msra.mxu0 %v500
        %539 = vmatprep.subr.bf16.mxu0 0
        %540 = vmatpush1.bf16.msra.mxu0 %v501
        %541 = vmatprep.subr.bf16.mxu0 0
        %542 = vmatpush1.bf16.msra.mxu0 %v502
        %543 = vmatprep.subr.bf16.mxu0 0
        %544 = vmatpush1.bf16.msra.mxu0 %v503
        %545 = vmatprep.subr.bf16.mxu0 0
        %546 = vmatpush1.bf16.msra.mxu0 %v504
        %547 = vmatprep.subr.bf16.mxu0 0
        %548 = vmatpush1.bf16.msra.mxu0 %v505
        %549 = vmatprep.subr.bf16.mxu0 0
        %550 = vmatpush1.bf16.msra.mxu0 %v506
        %551 = vmatprep.subr.bf16.mxu0 0
        %552 = vmatpush1.bf16.msra.mxu0 %v507
        %553 = vmatprep.subr.bf16.mxu0 0
        %554 = vmatpush1.bf16.msra.mxu0 %v508
        %555 = vmatprep.subr.bf16.mxu0 0
        %556 = vmatpush1.bf16.msra.mxu0 %v509
        %557 = vmatprep.subr.bf16.mxu0 0
        %558 = vmatpush1.bf16.msra.mxu0 %v510
        %559 = vmatprep.mubr.bf16.mxu0 %v400
        %560 = vmatmul.mubr.bf16.gmra.mrb[0].mxu0 %v399
        %v561 = vpop.f32.mrb[0].mxu0
        %v562 = vadd.f32 0.0, %v561
        %v563 = vpop.f32.mrb[0].mxu0
        %v564 = vpop.f32.mrb[0].mxu0
        %v565 = vadd.f32 0.0, %v564
        %v566 = vpop.f32.mrb[0].mxu0
        %567 = vmatprep.mubr.bf16.mxu0 %v402
        %568 = vmatmul.mubr.bf16.gmra.mrb[0].mxu0 %v401
        %v569 = vpop.f32.mrb[0].mxu0
        %v570 = vadd.f32 0.0, %v569
        %v571 = vpop.f32.mrb[0].mxu0
        %v572 = vpop.f32.mrb[0].mxu0
        %v573 = vadd.f32 0.0, %v572
        %v574 = vpop.f32.mrb[0].mxu0
        %575 = vmatprep.mubr.bf16.mxu0 %v404
        %576 = vmatmul.mubr.bf16.gmra.mrb[0].mxu0 %v403
        %v577 = vpop.f32.mrb[0].mxu0
        %v578 = vadd.f32 0.0, %v577
        %v579 = vpop.f32.mrb[0].mxu0
        %v580 = vpop.f32.mrb[0].mxu0
        %v581 = vadd.f32 0.0, %v580
        %v582 = vpop.f32.mrb[0].mxu0
        %583 = vmatprep.mubr.bf16.mxu0 %v406
        %584 = vmatmul.mubr.bf16.gmra.mrb[0].mxu0 %v405
        %v585 = vpop.f32.mrb[0].mxu0
        %v586 = vadd.f32 0.0, %v585
        %v587 = vpop.f32.mrb[0].mxu0
        %v588 = vpop.f32.mrb[0].mxu0
        %v589 = vadd.f32 0.0, %v588
        %v590 = vpop.f32.mrb[0].mxu0
        %591 = vmatprep.mubr.bf16.mxu0 %v408
        %592 = vmatmul.mubr.bf16.gmra.mrb[0].mxu0 %v407
        %v593 = vpop.f32.mrb[0].mxu0
        %v594 = vadd.f32 0.0, %v593
        %v595 = vpop.f32.mrb[0].mxu0
        %v596 = vpop.f32.mrb[0].mxu0
        %v597 = vadd.f32 0.0, %v596
        %v598 = vpop.f32.mrb[0].mxu0
        %599 = vmatprep.mubr.bf16.mxu0 %v410
        %600 = vmatmul.mubr.bf16.gmra.mrb[0].mxu0 %v409
        %v601 = vpop.f32.mrb[0].mxu0
        %v602 = vadd.f32 0.0, %v601
        %v603 = vpop.f32.mrb[0].mxu0
        %v604 = vpop.f32.mrb[0].mxu0
        %v605 = vadd.f32 0.0, %v604
        %v606 = vpop.f32.mrb[0].mxu0
        %607 = vmatprep.mubr.bf16.mxu0 %v412
        %608 = vmatmul.mubr.bf16.gmra.mrb[0].mxu0 %v411
        %v609 = vpop.f32.mrb[0].mxu0
        %v610 = vadd.f32 0.0, %v609
        %v611 = vpop.f32.mrb[0].mxu0
        %v612 = vpop.f32.mrb[0].mxu0
        %v613 = vadd.f32 0.0, %v612
        %v614 = vpop.f32.mrb[0].mxu0
        %615 = vmatprep.mubr.bf16.mxu0 %v414
        %616 = vmatmul.mubr.bf16.gmra.mrb[0].mxu0 %v413
        %v617 = vpop.f32.mrb[0].mxu0
        %v618 = vadd.f32 0.0, %v617
        %v619 = vpop.f32.mrb[0].mxu0
        %v620 = vpop.f32.mrb[0].mxu0
        %v621 = vadd.f32 0.0, %v620
        %v622 = vpop.f32.mrb[0].mxu0
        %623 = vdwg.mxu0
        %v624 = vpack.c.bf16 %v565, %v562
        %v625 = vpack.c.bf16 %v573, %v570
        %v626 = vpack.c.bf16 %v581, %v578
        %v627 = vpack.c.bf16 %v589, %v586
        %v628 = vpack.c.bf16 %v597, %v594
        %v629 = vpack.c.bf16 %v605, %v602
        %v630 = vpack.c.bf16 %v613, %v610
        %v631 = vpack.c.bf16 %v621, %v618
        %v632 = vld [vmem:[#allocation7] sm:$0xf]
        %v633 = vld [vmem:[#allocation7 + $0x4] sm:$0xf]
        %v634 = vld [vmem:[#allocation7 + $0x8] sm:$0xf]
        %v635 = vld [vmem:[#allocation7 + $0xc] sm:$0xf]
        %v636 = vld [vmem:[#allocation7 + $0x10] sm:$0xf]
        %v637 = vld [vmem:[#allocation7 + $0x14] sm:$0xf]
        %v638 = vld [vmem:[#allocation7 + $0x18] sm:$0xf]
        %v639 = vld [vmem:[#allocation7 + $0x1c] sm:$0xf]
        %v640 = vld [vmem:[#allocation7 + $0x20] sm:$0xf]
        %v641 = vld [vmem:[#allocation7 + $0x24] sm:$0xf]
        %v642 = vld [vmem:[#allocation7 + $0x28] sm:$0xf]
        %v643 = vld [vmem:[#allocation7 + $0x2c] sm:$0xf]
        %v644 = vld [vmem:[#allocation7 + $0x30] sm:$0xf]
        %v645 = vld [vmem:[#allocation7 + $0x34] sm:$0xf]
        %v646 = vld [vmem:[#allocation7 + $0x38] sm:$0xf]
        %v647 = vld [vmem:[#allocation7 + $0x3c] sm:$0xf]
        %v648 = vld [vmem:[#allocation8] sm:$0x1]
        %v650 = vlaneseq
        %v651 = vshrl.u32 %v650, 7
        %v652 = vsub.s32 0, %v651
        %v653 = vrot.slane %v648, %v652
        %v671 = vunpack.c.l.b16 %v632
        %v672 = vunpack.c.l.b16 %v633
        %v673 = vunpack.c.l.b16 %v634
        %v674 = vunpack.c.l.b16 %v635
        %v675 = vunpack.c.l.b16 %v636
        %v676 = vunpack.c.l.b16 %v637
        %v677 = vunpack.c.l.b16 %v638
        %v678 = vunpack.c.l.b16 %v639
        %v679 = vunpack.c.l.b16 %v640
        %v680 = vunpack.c.l.b16 %v641
        %v681 = vunpack.c.l.b16 %v642
        %v682 = vunpack.c.l.b16 %v643
        %v683 = vunpack.c.l.b16 %v644
        %v684 = vunpack.c.l.b16 %v645
        %v685 = vunpack.c.l.b16 %v646
        %v686 = vunpack.c.l.b16 %v647
        %v687 = vpack.c.b16 %v672, %v671
        %v688 = vpack.c.b16 %v674, %v673
        %v689 = vpack.c.b16 %v676, %v675
        %v690 = vpack.c.b16 %v678, %v677
        %v691 = vpack.c.b16 %v680, %v679
        %v692 = vpack.c.b16 %v682, %v681
        %v693 = vpack.c.b16 %v684, %v683
        %v694 = vpack.c.b16 %v686, %v685
        %703 = vmatprep.subr.bf16.mxu0 0
        %704 = vmatpush1.bf16.msra.mxu0 %v687
        %705 = vmatprep.subr.bf16.mxu0 0
        %706 = vmatpush1.bf16.msra.mxu0 %v688
        %707 = vmatprep.subr.bf16.mxu0 0
        %708 = vmatpush1.bf16.msra.mxu0 %v689
        %709 = vmatprep.subr.bf16.mxu0 0
        %710 = vmatpush1.bf16.msra.mxu0 %v690
        %711 = vmatprep.subr.bf16.mxu0 0
        %712 = vmatpush1.bf16.msra.mxu0 %v691
        %713 = vmatprep.subr.bf16.mxu0 0
        %714 = vmatpush1.bf16.msra.mxu0 %v692
        %715 = vmatprep.subr.bf16.mxu0 0
        %716 = vmatpush1.bf16.msra.mxu0 %v693
        %717 = vmatprep.subr.bf16.mxu0 0
        %718 = vmatpush1.bf16.msra.mxu0 %v694
        %719 = vmatprep.subr.bf16.mxu0 0
        %720 = vmatpush1.bf16.msra.mxu0 0
        %721 = vmatprep.subr.bf16.mxu0 0
        %722 = vmatpush1.bf16.msra.mxu0 0
        %723 = vmatprep.subr.bf16.mxu0 0
        %724 = vmatpush1.bf16.msra.mxu0 0
        %725 = vmatprep.subr.bf16.mxu0 0
        %726 = vmatpush1.bf16.msra.mxu0 0
        %727 = vmatprep.subr.bf16.mxu0 0
        %728 = vmatpush1.bf16.msra.mxu0 0
        %729 = vmatprep.subr.bf16.mxu0 0
        %730 = vmatpush1.bf16.msra.mxu0 0
        %731 = vmatprep.subr.bf16.mxu0 0
        %732 = vmatpush1.bf16.msra.mxu0 0
        %733 = vmatprep.subr.bf16.mxu0 0
        %734 = vmatpush1.bf16.msra.mxu0 0
        %735 = vmatprep.mubr.bf16.mxu0 0
        %736 = vmatmul.mubr.bf16.gmra.mrb[0].mxu0 %v624
        %v737 = vpop.f32.mrb[0].mxu0
        %v738 = vadd.f32 %v653, %v737
        %v739 = vpop.f32.mrb[0].mxu0
        %v740 = vpop.f32.mrb[0].mxu0
        %v741 = vadd.f32 %v653, %v740
        %v742 = vpop.f32.mrb[0].mxu0
        %743 = vmatprep.mubr.bf16.mxu0 0
        %744 = vmatmul.mubr.bf16.gmra.mrb[0].mxu0 %v625
        %v745 = vpop.f32.mrb[0].mxu0
        %v746 = vadd.f32 %v653, %v745
        %v747 = vpop.f32.mrb[0].mxu0
        %v748 = vpop.f32.mrb[0].mxu0
        %v749 = vadd.f32 %v653, %v748
        %v750 = vpop.f32.mrb[0].mxu0
        %751 = vmatprep.mubr.bf16.mxu0 0
        %752 = vmatmul.mubr.bf16.gmra.mrb[0].mxu0 %v626
        %v753 = vpop.f32.mrb[0].mxu0
        %v754 = vadd.f32 %v653, %v753
        %v755 = vpop.f32.mrb[0].mxu0
        %v756 = vpop.f32.mrb[0].mxu0
        %v757 = vadd.f32 %v653, %v756
        %v758 = vpop.f32.mrb[0].mxu0
        %759 = vmatprep.mubr.bf16.mxu0 0
        %760 = vmatmul.mubr.bf16.gmra.mrb[0].mxu0 %v627
        %v761 = vpop.f32.mrb[0].mxu0
        %v762 = vadd.f32 %v653, %v761
        %v763 = vpop.f32.mrb[0].mxu0
        %v764 = vpop.f32.mrb[0].mxu0
        %v765 = vadd.f32 %v653, %v764
        %v766 = vpop.f32.mrb[0].mxu0
        %767 = vmatprep.mubr.bf16.mxu0 0
        %768 = vmatmul.mubr.bf16.gmra.mrb[0].mxu0 %v628
        %v769 = vpop.f32.mrb[0].mxu0
        %v770 = vadd.f32 %v653, %v769
        %v771 = vpop.f32.mrb[0].mxu0
        %v772 = vpop.f32.mrb[0].mxu0
        %v773 = vadd.f32 %v653, %v772
        %v774 = vpop.f32.mrb[0].mxu0
        %775 = vmatprep.mubr.bf16.mxu0 0
        %776 = vmatmul.mubr.bf16.gmra.mrb[0].mxu0 %v629
        %v777 = vpop.f32.mrb[0].mxu0
        %v778 = vadd.f32 %v653, %v777
        %v779 = vpop.f32.mrb[0].mxu0
        %v780 = vpop.f32.mrb[0].mxu0
        %v781 = vadd.f32 %v653, %v780
        %v782 = vpop.f32.mrb[0].mxu0
        %783 = vmatprep.mubr.bf16.mxu0 0
        %784 = vmatmul.mubr.bf16.gmra.mrb[0].mxu0 %v630
        %v785 = vpop.f32.mrb[0].mxu0
        %v786 = vadd.f32 %v653, %v785
        %v787 = vpop.f32.mrb[0].mxu0
        %v788 = vpop.f32.mrb[0].mxu0
        %v789 = vadd.f32 %v653, %v788
        %v790 = vpop.f32.mrb[0].mxu0
        %791 = vmatprep.mubr.bf16.mxu0 0
        %792 = vmatmul.mubr.bf16.gmra.mrb[0].mxu0 %v631
        %v793 = vpop.f32.mrb[0].mxu0
        %v794 = vadd.f32 %v653, %v793
        %v795 = vpop.f32.mrb[0].mxu0
        %v796 = vpop.f32.mrb[0].mxu0
        %v797 = vadd.f32 %v653, %v796
        %v798 = vpop.f32.mrb[0].mxu0
        %799 = vdwg.mxu0
        %v800 = vmax.f32 %v738, 0.0
        %v801 = vmax.f32 %v741, 0.0
        %v802 = vmax.f32 %v746, 0.0
        %v803 = vmax.f32 %v749, 0.0
        %v804 = vmax.f32 %v754, 0.0
        %v805 = vmax.f32 %v757, 0.0
        %v806 = vmax.f32 %v762, 0.0
        %v807 = vmax.f32 %v765, 0.0
        %v808 = vmax.f32 %v770, 0.0
        %v809 = vmax.f32 %v773, 0.0
        %v810 = vmax.f32 %v778, 0.0
        %v811 = vmax.f32 %v781, 0.0
        %v812 = vmax.f32 %v786, 0.0
        %v813 = vmax.f32 %v789, 0.0
        %v814 = vmax.f32 %v794, 0.0
        %v815 = vmax.f32 %v797, 0.0
        %v816 = vpack.c.bf16 %v801, %v800
        %v817 = vpack.c.bf16 %v803, %v802
        %v818 = vpack.c.bf16 %v805, %v804
        %v819 = vpack.c.bf16 %v807, %v806
        %v820 = vpack.c.bf16 %v809, %v808
        %v821 = vpack.c.bf16 %v811, %v810
        %v822 = vpack.c.bf16 %v813, %v812
        %v823 = vpack.c.bf16 %v815, %v814
        %v824 = vld [vmem:[#allocation10] sm:$0xf]
        %v825 = vld [vmem:[#allocation10 + $0x4] sm:$0xf]
        %v826 = vld [vmem:[#allocation10 + $0x8] sm:$0xf]
        %v827 = vld [vmem:[#allocation10 + $0xc] sm:$0xf]
        %v828 = vld [vmem:[#allocation10 + $0x10] sm:$0xf]
        %v829 = vld [vmem:[#allocation10 + $0x14] sm:$0xf]
        %v830 = vld [vmem:[#allocation10 + $0x18] sm:$0xf]
        %v831 = vld [vmem:[#allocation10 + $0x1c] sm:$0xf]
        %v832 = vld [vmem:[#allocation10 + $0x20] sm:$0xf]
        %v833 = vld [vmem:[#allocation10 + $0x24] sm:$0xf]
        %v834 = vld [vmem:[#allocation10 + $0x28] sm:$0xf]
        %v835 = vld [vmem:[#allocation10 + $0x2c] sm:$0xf]
        %v836 = vld [vmem:[#allocation10 + $0x30] sm:$0xf]
        %v837 = vld [vmem:[#allocation10 + $0x34] sm:$0xf]
        %v838 = vld [vmem:[#allocation10 + $0x38] sm:$0xf]
        %v839 = vld [vmem:[#allocation10 + $0x3c] sm:$0xf]
        %v856 = vunpack.c.l.b16 %v824
        %v857 = vunpack.c.l.b16 %v825
        %v858 = vunpack.c.l.b16 %v826
        %v859 = vunpack.c.l.b16 %v827
        %v860 = vunpack.c.l.b16 %v828
        %v861 = vunpack.c.l.b16 %v829
        %v862 = vunpack.c.l.b16 %v830
        %v863 = vunpack.c.l.b16 %v831
        %v864 = vunpack.c.l.b16 %v832
        %v865 = vunpack.c.l.b16 %v833
        %v866 = vunpack.c.l.b16 %v834
        %v867 = vunpack.c.l.b16 %v835
        %v868 = vunpack.c.l.b16 %v836
        %v869 = vunpack.c.l.b16 %v837
        %v870 = vunpack.c.l.b16 %v838
        %v871 = vunpack.c.l.b16 %v839
        %v872 = vpack.c.b16 %v857, %v856
        %v873 = vpack.c.b16 %v859, %v858
        %v874 = vpack.c.b16 %v861, %v860
        %v875 = vpack.c.b16 %v863, %v862
        %v876 = vpack.c.b16 %v865, %v864
        %v877 = vpack.c.b16 %v867, %v866
        %v878 = vpack.c.b16 %v869, %v868
        %v879 = vpack.c.b16 %v871, %v870
        %888 = vmatprep.subr.bf16.mxu0 0
        %889 = vmatpush1.bf16.msra.mxu0 %v872
        %890 = vmatprep.subr.bf16.mxu0 0
        %891 = vmatpush1.bf16.msra.mxu0 %v873
        %892 = vmatprep.subr.bf16.mxu0 0
        %893 = vmatpush1.bf16.msra.mxu0 %v874
        %894 = vmatprep.subr.bf16.mxu0 0
        %895 = vmatpush1.bf16.msra.mxu0 %v875
        %896 = vmatprep.subr.bf16.mxu0 0
        %897 = vmatpush1.bf16.msra.mxu0 %v876
        %898 = vmatprep.subr.bf16.mxu0 0
        %899 = vmatpush1.bf16.msra.mxu0 %v877
        %900 = vmatprep.subr.bf16.mxu0 0
        %901 = vmatpush1.bf16.msra.mxu0 %v878
        %902 = vmatprep.subr.bf16.mxu0 0
        %903 = vmatpush1.bf16.msra.mxu0 %v879
        %904 = vmatprep.subr.bf16.mxu0 0
        %905 = vmatpush1.bf16.msra.mxu0 0
        %906 = vmatprep.subr.bf16.mxu0 0
        %907 = vmatpush1.bf16.msra.mxu0 0
        %908 = vmatprep.subr.bf16.mxu0 0
        %909 = vmatpush1.bf16.msra.mxu0 0
        %910 = vmatprep.subr.bf16.mxu0 0
        %911 = vmatpush1.bf16.msra.mxu0 0
        %912 = vmatprep.subr.bf16.mxu0 0
        %913 = vmatpush1.bf16.msra.mxu0 0
        %914 = vmatprep.subr.bf16.mxu0 0
        %915 = vmatpush1.bf16.msra.mxu0 0
        %916 = vmatprep.subr.bf16.mxu0 0
        %917 = vmatpush1.bf16.msra.mxu0 0
        %918 = vmatprep.subr.bf16.mxu0 0
        %919 = vmatpush1.bf16.msra.mxu0 0
        %920 = vmatprep.mubr.bf16.mxu0 0
        %921 = vmatmul.mubr.bf16.gmra.mrb[0].mxu0 %v816
        %v922 = vpop.f32.mrb[0].mxu0
        %v923 = vadd.f32 0.0, %v922
        %v924 = vpop.f32.mrb[0].mxu0
        %v925 = vpop.f32.mrb[0].mxu0
        %v926 = vadd.f32 0.0, %v925
        %v927 = vpop.f32.mrb[0].mxu0
        %928 = vmatprep.mubr.bf16.mxu0 0
        %929 = vmatmul.mubr.bf16.gmra.mrb[0].mxu0 %v817
        %v930 = vpop.f32.mrb[0].mxu0
        %v931 = vadd.f32 0.0, %v930
        %v932 = vpop.f32.mrb[0].mxu0
        %v933 = vpop.f32.mrb[0].mxu0
        %v934 = vadd.f32 0.0, %v933
        %v935 = vpop.f32.mrb[0].mxu0
        %936 = vmatprep.mubr.bf16.mxu0 0
        %937 = vmatmul.mubr.bf16.gmra.mrb[0].mxu0 %v818
        %v938 = vpop.f32.mrb[0].mxu0
        %v939 = vadd.f32 0.0, %v938
        %v940 = vpop.f32.mrb[0].mxu0
        %v941 = vpop.f32.mrb[0].mxu0
        %v942 = vadd.f32 0.0, %v941
        %v943 = vpop.f32.mrb[0].mxu0
        %944 = vmatprep.mubr.bf16.mxu0 0
        %945 = vmatmul.mubr.bf16.gmra.mrb[0].mxu0 %v819
        %v946 = vpop.f32.mrb[0].mxu0
        %v947 = vadd.f32 0.0, %v946
        %v948 = vpop.f32.mrb[0].mxu0
        %v949 = vpop.f32.mrb[0].mxu0
        %v950 = vadd.f32 0.0, %v949
        %v951 = vpop.f32.mrb[0].mxu0
        %952 = vmatprep.mubr.bf16.mxu0 0
        %953 = vmatmul.mubr.bf16.gmra.mrb[0].mxu0 %v820
        %v954 = vpop.f32.mrb[0].mxu0
        %v955 = vadd.f32 0.0, %v954
        %v956 = vpop.f32.mrb[0].mxu0
        %v957 = vpop.f32.mrb[0].mxu0
        %v958 = vadd.f32 0.0, %v957
        %v959 = vpop.f32.mrb[0].mxu0
        %960 = vmatprep.mubr.bf16.mxu0 0
        %961 = vmatmul.mubr.bf16.gmra.mrb[0].mxu0 %v821
        %v962 = vpop.f32.mrb[0].mxu0
        %v963 = vadd.f32 0.0, %v962
        %v964 = vpop.f32.mrb[0].mxu0
        %v965 = vpop.f32.mrb[0].mxu0
        %v966 = vadd.f32 0.0, %v965
        %v967 = vpop.f32.mrb[0].mxu0
        %968 = vmatprep.mubr.bf16.mxu0 0
        %969 = vmatmul.mubr.bf16.gmra.mrb[0].mxu0 %v822
        %v970 = vpop.f32.mrb[0].mxu0
        %v971 = vadd.f32 0.0, %v970
        %v972 = vpop.f32.mrb[0].mxu0
        %v973 = vpop.f32.mrb[0].mxu0
        %v974 = vadd.f32 0.0, %v973
        %v975 = vpop.f32.mrb[0].mxu0
        %976 = vmatprep.mubr.bf16.mxu0 0
        %977 = vmatmul.mubr.bf16.gmra.mrb[0].mxu0 %v823
        %v978 = vpop.f32.mrb[0].mxu0
        %v979 = vadd.f32 0.0, %v978
        %v980 = vpop.f32.mrb[0].mxu0
        %v981 = vpop.f32.mrb[0].mxu0
        %v982 = vadd.f32 0.0, %v981
        %v983 = vpop.f32.mrb[0].mxu0
        %984 = vdwg.mxu0
        %v985 = vpack.c.bf16 %v926, %v923
        %v986 = vpack.c.bf16 %v934, %v931
        %v987 = vpack.c.bf16 %v942, %v939
        %v988 = vpack.c.bf16 %v950, %v947
        %v989 = vpack.c.bf16 %v958, %v955
        %v990 = vpack.c.bf16 %v966, %v963
        %v991 = vpack.c.bf16 %v974, %v971
        %v992 = vpack.c.bf16 %v982, %v979
        %v1001 = vunpack.c.l.b16 %v985
        %v1002 = vunpack.c.h.b16 %v985
        %v1003 = vunpack.c.l.b16 %v986
        %v1004 = vunpack.c.h.b16 %v986
        %v1005 = vunpack.c.l.b16 %v987
        %v1006 = vunpack.c.h.b16 %v987
        %v1007 = vunpack.c.l.b16 %v988
        %v1008 = vunpack.c.h.b16 %v988
        %v1009 = vunpack.c.l.b16 %v989
        %v1010 = vunpack.c.h.b16 %v989
        %v1011 = vunpack.c.l.b16 %v990
        %v1012 = vunpack.c.h.b16 %v990
        %v1013 = vunpack.c.l.b16 %v991
        %v1014 = vunpack.c.h.b16 %v991
        %v1015 = vunpack.c.l.b16 %v992
        %v1016 = vunpack.c.h.b16 %v992
        %v1017 = vpack.c.b16 %v1001, %v1001
        %v1018 = vpack.c.b16 %v1002, %v1002
        %v1019 = vpack.c.b16 %v1003, %v1003
        %v1020 = vpack.c.b16 %v1004, %v1004
        %v1021 = vpack.c.b16 %v1005, %v1005
        %v1022 = vpack.c.b16 %v1006, %v1006
        %v1023 = vpack.c.b16 %v1007, %v1007
        %v1024 = vpack.c.b16 %v1008, %v1008
        %v1025 = vpack.c.b16 %v1009, %v1009
        %v1026 = vpack.c.b16 %v1010, %v1010
        %v1027 = vpack.c.b16 %v1011, %v1011
        %v1028 = vpack.c.b16 %v1012, %v1012
        %v1029 = vpack.c.b16 %v1013, %v1013
        %v1030 = vpack.c.b16 %v1014, %v1014
        %v1031 = vpack.c.b16 %v1015, %v1015
        %v1032 = vpack.c.b16 %v1016, %v1016
        %1049 = vst [vmem:[%s299] sm:$0xf] %v1017
        %1050 = vst [vmem:[%s299 + $0x4] sm:$0xf] %v1018
        %1051 = vst [vmem:[%s299 + $0x8] sm:$0xf] %v1019
        %1052 = vst [vmem:[%s299 + $0xc] sm:$0xf] %v1020
        %1053 = vst [vmem:[%s299 + $0x10] sm:$0xf] %v1021
        %1054 = vst [vmem:[%s299 + $0x14] sm:$0xf] %v1022
        %1055 = vst [vmem:[%s299 + $0x18] sm:$0xf] %v1023
        %1056 = vst [vmem:[%s299 + $0x1c] sm:$0xf] %v1024
        %1057 = vst [vmem:[%s299 + $0x20] sm:$0xf] %v1025
        %1058 = vst [vmem:[%s299 + $0x24] sm:$0xf] %v1026
        %1059 = vst [vmem:[%s299 + $0x28] sm:$0xf] %v1027
        %1060 = vst [vmem:[%s299 + $0x2c] sm:$0xf] %v1028
        %1061 = vst [vmem:[%s299 + $0x30] sm:$0xf] %v1029
        %1062 = vst [vmem:[%s299 + $0x34] sm:$0xf] %v1030
        %1063 = vst [vmem:[%s299 + $0x38] sm:$0xf] %v1031
        %1064 = vst [vmem:[%s299 + $0x3c] sm:$0xf] %v1032
        %s1065 = sand.u32 %s142, 1
        %s1066 = scalar_lea.sflag [#allocation4], %s1065
        %s1067 = sand.u32 %s142, 1
        %s1068 = smul.addr %s1067, 64
        %s1069 = scalar_lea.vmem [#allocation11], %s1068
        // Predicated region
        $region61: #{gcn_forward.2} parent=39 // pred_check
          %p1070 = pneg %p152
        $region62: #{gcn_forward.2} parent=39 // pred_check_branch
          %1072 = sbr.rel (%p1070) target = $region64
        $region63: #{gcn_forward.2} parent=39 // pred_region
          %s1073 = smul.u32 16, %s24
          %s1075 = ssub.s32 1024, 1024
          %1076 = vsyncadd %s1066, %s1075
          %s1077 = smul.addr %s1073, 64
          %s1078 = scalar_lea.hbm %s5, %s1077
          %s1079 = sshll.u32 %s1069, 4
          %s1080 = int_to_ptr.vmem [resolvable:$true] %s1079
          %1085 = dma.vmem_to_hbm [thread:$0]  %s1080, 1024, %s1078, %s1066, 64, 64, 4
        $region64: #{gcn_forward.2} parent=39 // pred_fallthru
          _
      $region40: #{gcn_forward.2} parent=5 // pred_fallthru
        _
      %p1086 = scmp.le.s32.totalorder 2, %s19
      // Predicated region
      $region65: #{gcn_forward.2} parent=5 // pred_check
        %p1087 = pneg %p1086
      $region66: #{gcn_forward.2} parent=5 // pred_check_branch
        %1089 = sbr.rel (%p1087) target = $region68
      $region67: #{gcn_forward.2} parent=5 // pred_region
        %s1090 = ssub.s32 %s19, 2
        // Predicated region
        $region69: #{gcn_forward.2} parent=67 // pred_check
          %p1091 = pneg %p158
        $region70: #{gcn_forward.2} parent=67 // pred_check_branch
          %1093 = sbr.rel (%p1091) target = $region72
        $region71: #{gcn_forward.2} parent=67 // pred_region
          %s1094 = sand.u32 %s143, 1
          %s1095 = scalar_lea.sflag [#allocation4], %s1094
          %s1096 = sand.u32 %s143, 1
          %s1097 = smul.addr %s1096, 64
          %s1098 = scalar_lea.vmem [#allocation11], %s1097
          %1099 = dma.done %s1095, 1024
        $region72: #{gcn_forward.2} parent=67 // pred_fallthru
          _
      $region68: #{gcn_forward.2} parent=5 // pred_fallthru
        _
    $region6: #{gcn_forward.2} parent=1 // loop_footer
      %s23 = sadd.s32 1, %s19
    $region7: #{gcn_forward.2} parent=1 // loop_footer_branch
      %18 = sbr.rel target = $region3
    $region8: #{gcn_forward.2} parent=1 // loop_exit
      _
    %1100 = vsyncpa [#allocation3], 1
    %s1101 = scalar_lea.sflag [#allocation3], 1
    %1102 = vsyncpa %s1101, 1
    %1103 = vsyncpa [#allocation6], 1
    %1104 = vsyncpa [#allocation9], 1
    %1105 = vsyncpa [#allocation4], 1
    %s1106 = scalar_lea.sflag [#allocation4], 1
    %1107 = vsyncpa %s1106, 1

</llo_original>
